<compile_context>
chip_gen: v6e
topology: v6e:2x2x1
jax: 0.10.0
libtpu: 0.0.40
codegen_flags: <defaults>
</compile_context>

<pallas_src>
import functools
import math

import jax
import jax.numpy as jnp
from jax import lax
from jax.experimental import pallas as pl
from jax.experimental.pallas import tpu as pltpu


def _round_up(x, m):
    return ((x + m - 1) // m) * m


def _default_block_rows():
    # v6e / v7x have a 256-wide MXU -> TM=256; v2..v5 keep TM=128 (128-wide MXU,
    # weaker EUP for the softmax tail on v5e).
    try:
        kind = jax.devices()[0].device_kind.lower()
    except Exception:
        return 128
    for tag in ("v2", "v3", "v4", "v5"):
        if tag in kind:
            return 128
    return 256


def _vmem_budget_bytes():
    # Honest per-generation budget: physical VMEM minus ~16 MiB headroom
    # (v7x: 64 MiB, v5e/v6e: 128 MiB).  Fall back to the v7x minimum if the
    # query fails so the limit is safe on every generation.
    try:
        cap = int(pltpu.get_tpu_info().vmem_capacity_bytes)
    except Exception:
        cap = 64 * 1024 * 1024
    return cap - 16 * 1024 * 1024


def _supcon_flash_kernel(anc_ref, featT_ref, rlab_ref, clab_ref, out_ref,
                         m_ref, l_ref, cnt_ref, psum_ref, *,
                         loss_coeff, n_valid, tm, tn, precision):
    """Anchor row block i against contrast column strip j (online softmax)."""
    i = pl.program_id(0)
    j = pl.program_id(1)

    @pl.when(j == 0)
    def _():
        m_ref[...] = jnp.full_like(m_ref, -jnp.inf)
        l_ref[...] = jnp.zeros_like(l_ref)
        cnt_ref[...] = jnp.zeros_like(cnt_ref)
        psum_ref[...] = jnp.zeros_like(psum_ref)

    # [TM, Dp] x [Dp, TN] on the MXU (bf16 operands by default), f32 accumulation.
    # 1/temperature is already folded into the anchor rows host-side.
    logits = jnp.dot(anc_ref[...], featT_ref[...],
                     preferred_element_type=jnp.float32,
                     precision=precision)                                # [TM, TN]

    row_gid = i * tm + lax.broadcasted_iota(jnp.int32, (tm, 1), 0)       # [TM, 1]
    col_gid = j * tn + lax.broadcasted_iota(jnp.int32, (1, tn), 1)       # [1, TN]

    # Boolean masks; no [TM, TN] float-mask multiply passes.
    valid = jnp.logical_and(col_gid != row_gid, col_gid < n_valid)       # drop self + pad
    pos = jnp.logical_and(valid, rlab_ref[...] == clab_ref[...])         # positives

    # Online (flash-style) masked log-sum-exp across the column strips.
    masked = jnp.where(valid, logits, -jnp.inf)
    m_new = jnp.maximum(m_ref[...], jnp.max(masked, axis=1, keepdims=True))
    alpha = jnp.exp(m_ref[...] - m_new)
    l_ref[...] = alpha * l_ref[...] + jnp.sum(jnp.exp(masked - m_new),
                                              axis=1, keepdims=True)
    m_ref[...] = m_new

    # Running positive statistics (plain sums, no rescale needed).
    psum_ref[...] += jnp.sum(jnp.where(pos, logits, 0.0), axis=1, keepdims=True)
    cnt_ref[...] += jnp.sum(jnp.where(pos, 1.0, 0.0), axis=1, keepdims=True)

    @pl.when(j == pl.num_programs(1) - 1)
    def _():
        # mean_{k in P(i)} log_prob = (sum_k pos*logits - |P(i)| * lse) / |P(i)|
        lse = m_ref[...] + jnp.log(l_ref[...])
        cnt = cnt_ref[...]
        # TODO(synk): PyTorch's zero-positive neighbour-divisor fallback is not
        # reproduced; anchors with no positives contribute 0 (requires n_views >= 2).
        mean_log_prob_pos = (psum_ref[...] - cnt * lse) / jnp.maximum(cnt, 1.0)
        loss_rows = loss_coeff * mean_log_prob_pos
        # Zero padded rows so the host can just sum and divide by N.
        out_ref[...] = jnp.where(row_gid < n_valid, loss_rows, 0.0)
        # TODO(synk): output block is [TM, 1] (masked vst); a lane-dense (1, TM)
        # layout would remove the masked-store epilogue (negligible for this size).


def supcon_loss_pallas(features, labels=None, mask=None,
                       temperature=0.07, contrast_mode='all',
                       base_temperature=0.07, block_rows=None, block_cols=512,
                       compute_dtype=jnp.bfloat16):
    """Pallas implementation of SupConLoss.forward (contrast_mode='all')."""
    if features.ndim < 3:
        raise ValueError('`features` needs to be [bsz, n_views, ...]')
    if contrast_mode != 'all':
        # TODO(synk): contrast_mode='one' (anchor = view 0 only) not implemented.
        raise NotImplementedError("only contrast_mode='all' is implemented")
    if labels is not None and mask is not None:
        raise ValueError('Cannot define both `labels` and `mask`')
    if mask is not None:
        # TODO(synk): an explicit (possibly asymmetric) user mask is not expressible
        # as a label-equality compare; not covered by the in-kernel-mask fast path.
        raise NotImplementedError('explicit `mask` is not supported by the Pallas kernel')

    bsz, n_views = features.shape[0], features.shape[1]
    feat = features.reshape(bsz, n_views, -1).astype(jnp.float32)
    d = feat.shape[-1]
    n = bsz * n_views

    # contrast_feature = cat(unbind(features, dim=1), dim=0) -> views-major [N, D].
    contrast = feat.transpose(1, 0, 2).reshape(n, d)

    if labels is None:
        labels_base = jnp.arange(bsz, dtype=jnp.int32)      # SimCLR identity mask
    else:
        labels_base = labels.reshape(-1).astype(jnp.int32)
        if labels_base.shape[0] != bsz:
            raise ValueError('Num of labels does not match num of features')
    labels_full = jnp.tile(labels_base, (n_views,))          # [N]

    # Tile selection: TM sized for the MXU generation, TN-wide column strips.
    if block_rows is None:
        block_rows = _default_block_rows()
    n128 = _round_up(n, 128)
    tm = min(int(block_rows), n128)
    tn = min(int(block_cols), n128)
    assert tm % 128 == 0 and tn % 128 == 0
    n_pad = _round_up(n, math.lcm(tm, tn))
    d_pad = _round_up(d, 128)
    grid = (n_pad // tm, n_pad // tn)

    cd = jnp.dtype(compute_dtype)
    inv_temp = 1.0 / float(temperature)
    # 1/temperature folded into the anchor rows (N*D muls, not N^2 divides);
    # operands stored in compute_dtype (bf16 by default: single-pass MXU, half
    # the DMA bytes) with f32 accumulation in-kernel.
    anchors = jnp.zeros((n_pad, d_pad), cd).at[:n, :d].set(
        (contrast * inv_temp).astype(cd))
    featT = jnp.zeros((d_pad, n_pad), cd).at[:d, :n].set(contrast.T.astype(cd))

    labels_pad = jnp.pad(labels_full, (0, n_pad - n))        # padded cols masked in-kernel
    row_lab = labels_pad.reshape(n_pad, 1)
    col_lab = labels_pad.reshape(1, n_pad)

    precision = (lax.Precision.HIGHEST
                 if cd == jnp.dtype(jnp.float32) else None)

    kernel = functools.partial(
        _supcon_flash_kernel,
        loss_coeff=float(-(temperature / base_temperature)),
        n_valid=n, tm=tm, tn=tn, precision=precision)

    # VMEM working set, kept in sync with the specs below: double-buffered anchor
    # slab + contrast^T strip, lane-padded label/output/scratch vectors, and a few
    # [TM, TN] f32 temporaries for the softmax/mask chain.
    vmem_need = (2 * tm * d_pad * cd.itemsize        # anchor rows (dbl-buffered)
                 + 2 * d_pad * tn * cd.itemsize      # contrast^T strip (dbl-buffered)
                 + 2 * tm * 128 * 4                  # row-label blocks (lane-padded)
                 + 2 * 8 * tn * 4                    # col-label strips
                 + 2 * tm * 128 * 4                  # output blocks
                 + 4 * tm * 128 * 4                  # m/l/cnt/psum scratch
                 + 6 * tm * tn * 4)                  # [TM, TN] f32 temporaries
    # TODO(synk): for very large D (>~8K) the D axis should also be strip-mined.
    vmem_limit = int(min(max(2 * vmem_need, 32 * 1024 * 1024), _vmem_budget_bytes()))

    per_row = pl.pallas_call(
        kernel,
        out_shape=jax.ShapeDtypeStruct((n_pad, 1), jnp.float32),
        grid_spec=pltpu.PrefetchScalarGridSpec(
            num_scalar_prefetch=0,
            grid=grid,
            in_specs=[
                pl.BlockSpec((tm, d_pad), lambda i, j: (i, 0)),   # anchor row slab
                pl.BlockSpec((d_pad, tn), lambda i, j: (0, j)),   # contrast^T strip
                pl.BlockSpec((tm, 1), lambda i, j: (i, 0)),       # row labels
                pl.BlockSpec((1, tn), lambda i, j: (0, j)),       # column labels
            ],
            out_specs=pl.BlockSpec((tm, 1), lambda i, j: (i, 0)), # per-row loss
            scratch_shapes=[pltpu.VMEM((tm, 1), jnp.float32)] * 4,
        ),
        compiler_params=pltpu.CompilerParams(
            dimension_semantics=("parallel", "arbitrary"),
            vmem_limit_bytes=vmem_limit,
        ),
    )(anchors, featT, row_lab, col_lab)

    # Padded rows were zeroed in-kernel; final mean over the N real anchors.
    return jnp.sum(per_row) / n


def supcon_loss_ref(features, labels=None, temperature=0.07, base_temperature=0.07):
    """Pure-JAX reference (contrast_mode='all'), full-f32 matmul."""
    bsz, n_views = features.shape[0], features.shape[1]
    feat = features.reshape(bsz, n_views, -1).astype(jnp.float32)
    cf = jnp.concatenate([feat[:, v] for v in range(n_views)], axis=0)
    n = bsz * n_views
    if labels is None:
        base_mask = jnp.eye(bsz, dtype=jnp.float32)
    else:
        labels = labels.reshape(-1, 1)
        base_mask = (labels == labels.T).astype(jnp.float32)
    m = jnp.tile(base_mask, (n_views, n_views))
    adc = jnp.dot(cf, cf.T, precision=lax.Precision.HIGHEST) / temperature
    logits = adc - jnp.max(adc, axis=1, keepdims=True)
    logits_mask = 1.0 - jnp.eye(n, dtype=jnp.float32)
    m = m * logits_mask
    exp_logits = jnp.exp(logits) * logits_mask
    log_prob = logits - jnp.log(jnp.sum(exp_logits, axis=1, keepdims=True))
    mean_log_prob_pos = jnp.sum(m * log_prob, axis=1) / jnp.sum(m, axis=1)
    loss = -(temperature / base_temperature) * mean_log_prob_pos
    return jnp.mean(loss)


if __name__ == "__main__":
    key = jax.random.PRNGKey(0)
    k1, k2, k3, k4 = jax.random.split(key, 4)

    # Case 1: small supervised + unsupervised (single grid block, padded rows/cols).
    bsz, n_views, dim = 8, 2, 32
    feats = jax.random.normal(k1, (bsz, n_views, dim), dtype=jnp.float32)
    feats = feats / jnp.linalg.norm(feats, axis=-1, keepdims=True)
    labels = jax.random.randint(k2, (bsz,), 0, 4, dtype=jnp.int32)

    ref = jax.block_until_ready(supcon_loss_ref(feats, labels=labels))
    out_f32 = jax.block_until_ready(
        supcon_loss_pallas(feats, labels=labels, compute_dtype=jnp.float32))
    out_bf16 = jax.block_until_ready(supcon_loss_pallas(feats, labels=labels))
    assert jnp.allclose(out_f32, ref, rtol=2e-3, atol=2e-3), (out_f32, ref)
    assert jnp.allclose(out_bf16, ref, rtol=5e-2, atol=5e-2), (out_bf16, ref)

    ref_u = jax.block_until_ready(supcon_loss_ref(feats))
    out_u = jax.block_until_ready(
        supcon_loss_pallas(feats, compute_dtype=jnp.float32))
    assert jnp.allclose(out_u, ref_u, rtol=2e-3, atol=2e-3), (out_u, ref_u)

    # Case 2: multiple row blocks and column strips (N=192 -> N_pad=256; explicit
    # 128x128 tiles give a 2x2 grid exercising the online-softmax accumulation and
    # the partially-padded column strip; default tiles exercised as well).
    bsz2, n_views2, dim2 = 96, 2, 48
    feats2 = jax.random.normal(k3, (bsz2, n_views2, dim2), dtype=jnp.float32)
    feats2 = feats2 / jnp.linalg.norm(feats2, axis=-1, keepdims=True)
    labels2 = jax.random.randint(k4, (bsz2,), 0, 10, dtype=jnp.int32)

    ref2 = jax.block_until_ready(supcon_loss_ref(feats2, labels=labels2))
    out2_tiled = jax.block_until_ready(
        supcon_loss_pallas(feats2, labels=labels2, compute_dtype=jnp.float32,
                           block_rows=128, block_cols=128))
    out2_default = jax.block_until_ready(supcon_loss_pallas(feats2, labels=labels2))
    assert jnp.allclose(out2_tiled, ref2, rtol=2e-3, atol=2e-3), (out2_tiled, ref2)
    assert jnp.allclose(out2_default, ref2, rtol=5e-2, atol=5e-2), (out2_default, ref2)

    print("KERNEL_OK")
</pallas_src>

<mosaic_0001>
module attributes {stable_mosaic.version = 11 : i64} {
  func.func @_supcon_flash_kernel(%arg0: i32, %arg1: i32, %arg2: memref<128x128xf32, #tpu.memory_space<vmem>>, %arg3: memref<128x128xf32, #tpu.memory_space<vmem>>, %arg4: memref<128x1xi32, #tpu.memory_space<vmem>>, %arg5: memref<1x128xi32, #tpu.memory_space<vmem>>, %arg6: memref<128x1xf32, #tpu.memory_space<vmem>>, %arg7: memref<128x1xf32, #tpu.memory_space<vmem>>, %arg8: memref<128x1xf32, #tpu.memory_space<vmem>>, %arg9: memref<128x1xf32, #tpu.memory_space<vmem>>, %arg10: memref<128x1xf32, #tpu.memory_space<vmem>>) attributes {dimension_semantics = [#tpu.dimension_semantics<parallel>, #tpu.dimension_semantics<arbitrary>], iteration_bounds = array<i64: 1, 1>, scalar_prefetch = 0 : i64, scratch_operands = 4 : i64, tpu.core_type = #tpu.core_type<tc>, window_params = [{transform_indices = @transform_0, window_bounds = array<i64: 128, 128>}, {transform_indices = @transform_1, window_bounds = array<i64: 128, 128>}, {transform_indices = @transform_2, window_bounds = array<i64: 128, 1>}, {transform_indices = @transform_3, window_bounds = array<i64: 1, 128>}, {transform_indices = @transform_4, window_bounds = array<i64: 128, 1>}]} {
    %c0_i32 = arith.constant 0 : i32
    %0 = arith.cmpi eq, %arg1, %c0_i32 : i32
    %1 = arith.extui %0 : i1 to i32
    %c0_i32_0 = arith.constant 0 : i32
    %2 = arith.cmpi ne, %1, %c0_i32_0 : i32
    scf.if %2 {
      %cst_37 = arith.constant 0xFF800000 : f32
      %64 = vector.broadcast %cst_37 : f32 to vector<128x1xf32>
      %c0_38 = arith.constant 0 : index
      %c0_39 = arith.constant 0 : index
      %65 = vector.load %arg7[%c0_38, %c0_39] : memref<128x1xf32, #tpu.memory_space<vmem>>, vector<128x1xf32>
      tpu.vector_store %arg7[%c0_38, %c0_39], %64 {strides = array<i32>} : memref<128x1xf32, #tpu.memory_space<vmem>>, vector<128x1xf32>,
      %cst_40 = arith.constant 0.000000e+00 : f32
      %66 = vector.broadcast %cst_40 : f32 to vector<128x1xf32>
      %c0_41 = arith.constant 0 : index
      %c0_42 = arith.constant 0 : index
      %67 = vector.load %arg8[%c0_41, %c0_42] : memref<128x1xf32, #tpu.memory_space<vmem>>, vector<128x1xf32>
      tpu.vector_store %arg8[%c0_41, %c0_42], %66 {strides = array<i32>} : memref<128x1xf32, #tpu.memory_space<vmem>>, vector<128x1xf32>,
      %cst_43 = arith.constant 0.000000e+00 : f32
      %68 = vector.broadcast %cst_43 : f32 to vector<128x1xf32>
      %c0_44 = arith.constant 0 : index
      %c0_45 = arith.constant 0 : index
      %69 = vector.load %arg9[%c0_44, %c0_45] : memref<128x1xf32, #tpu.memory_space<vmem>>, vector<128x1xf32>
      tpu.vector_store %arg9[%c0_44, %c0_45], %68 {strides = array<i32>} : memref<128x1xf32, #tpu.memory_space<vmem>>, vector<128x1xf32>,
      %cst_46 = arith.constant 0.000000e+00 : f32
      %70 = vector.broadcast %cst_46 : f32 to vector<128x1xf32>
      %c0_47 = arith.constant 0 : index
      %c0_48 = arith.constant 0 : index
      %71 = vector.load %arg10[%c0_47, %c0_48] : memref<128x1xf32, #tpu.memory_space<vmem>>, vector<128x1xf32>
      tpu.vector_store %arg10[%c0_47, %c0_48], %70 {strides = array<i32>} : memref<128x1xf32, #tpu.memory_space<vmem>>, vector<128x1xf32>,
    } else {
    }
    %c0 = arith.constant 0 : index
    %c0_1 = arith.constant 0 : index
    %3 = vector.load %arg2[%c0, %c0_1] : memref<128x128xf32, #tpu.memory_space<vmem>>, vector<128x128xf32>
    %c0_2 = arith.constant 0 : index
    %c0_3 = arith.constant 0 : index
    %4 = vector.load %arg3[%c0_2, %c0_3] : memref<128x128xf32, #tpu.memory_space<vmem>>, vector<128x128xf32>
    %cst = arith.constant dense<0.000000e+00> : vector<128x128xf32>
    %5 = tpu.matmul %3, %4, %cst {dimension_numbers = #tpu.dot_dimension_numbers<[1], [0], [0], [1], [0, 0, 1, 1], [], []>, precision = #tpu.contract_precision<fp32>} : vector<128x128xf32>, vector<128x128xf32>, vector<128x128xf32> -> vector<128x128xf32>
    %c128_i32 = arith.constant 128 : i32
    %6 = arith.muli %arg0, %c128_i32 : i32
    %7 = tpu.iota {dimensions = array<i32: 0>} : vector<128x1xi32>
    %8 = vector.broadcast %6 : i32 to vector<128x1xi32>
    %9 = arith.addi %8, %7 : vector<128x1xi32>
    %c128_i32_4 = arith.constant 128 : i32
    %10 = arith.muli %arg1, %c128_i32_4 : i32
    %11 = tpu.iota {dimensions = array<i32: 1>} : vector<1x128xi32>
    %12 = vector.broadcast %10 : i32 to vector<1x128xi32>
    %13 = arith.addi %12, %11 : vector<1x128xi32>
    %14 = vector.broadcast %13 : vector<1x128xi32> to vector<128x128xi32>
    %15 = vector.broadcast %9 : vector<128x1xi32> to vector<128x128xi32>
    %16 = arith.cmpi ne, %14, %15 : vector<128x128xi32>
    %c16_i32 = arith.constant 16 : i32
    %17 = vector.broadcast %c16_i32 : i32 to vector<1x128xi32>
    %18 = arith.cmpi slt, %13, %17 : vector<1x128xi32>
    %19 = vector.broadcast %18 : vector<1x128xi1> to vector<128x128xi1>
    %20 = arith.andi %16, %19 : vector<128x128xi1>
    %c0_5 = arith.constant 0 : index
    %c0_6 = arith.constant 0 : index
    %21 = vector.load %arg4[%c0_5, %c0_6] : memref<128x1xi32, #tpu.memory_space<vmem>>, vector<128x1xi32>
    %c0_7 = arith.constant 0 : index
    %c0_8 = arith.constant 0 : index
    %22 = vector.load %arg5[%c0_7, %c0_8] : memref<1x128xi32, #tpu.memory_space<vmem>>, vector<1x128xi32>
    %23 = vector.broadcast %21 : vector<128x1xi32> to vector<128x128xi32>
    %24 = vector.broadcast %22 : vector<1x128xi32> to vector<128x128xi32>
    %25 = arith.cmpi eq, %23, %24 : vector<128x128xi32>
    %26 = arith.andi %20, %25 : vector<128x128xi1>
    %cst_9 = arith.constant 0xFF800000 : f32
    %27 = vector.broadcast %cst_9 : f32 to vector<128x128xf32>
    %28 = arith.select %20, %5, %27 : vector<128x128xi1>, vector<128x128xf32>
    %c0_10 = arith.constant 0 : index
    %c0_11 = arith.constant 0 : index
    %29 = vector.load %arg7[%c0_10, %c0_11] : memref<128x1xf32, #tpu.memory_space<vmem>>, vector<128x1xf32>
    %cst_12 = arith.constant dense<0xFF800000> : vector<128xf32>
    %30 = vector.multi_reduction <maximumf>, %28, %cst_12 [1] : vector<128x128xf32> to vector<128xf32>
    %31 = vector.shape_cast %30 : vector<128xf32> to vector<128x1xf32>
    %32 = arith.maximumf %29, %31 : vector<128x1xf32>
    %c0_13 = arith.constant 0 : index
    %c0_14 = arith.constant 0 : index
    %33 = vector.load %arg7[%c0_13, %c0_14] : memref<128x1xf32, #tpu.memory_space<vmem>>, vector<128x1xf32>
    %34 = arith.subf %33, %32 : vector<128x1xf32>
    %35 = math.exp %34 : vector<128x1xf32>
    %c0_15 = arith.constant 0 : index
    %c0_16 = arith.constant 0 : index
    %36 = vector.load %arg8[%c0_15, %c0_16] : memref<128x1xf32, #tpu.memory_space<vmem>>, vector<128x1xf32>
    %37 = arith.mulf %35, %36 : vector<128x1xf32>
    %38 = vector.broadcast %32 : vector<128x1xf32> to vector<128x128xf32>
    %39 = arith.subf %28, %38 : vector<128x128xf32>
    %40 = math.exp %39 : vector<128x128xf32>
    %cst_17 = arith.constant dense<0.000000e+00> : vector<128xf32>
    %41 = vector.multi_reduction <add>, %40, %cst_17 [1] : vector<128x128xf32> to vector<128xf32>
    %42 = vector.shape_cast %41 : vector<128xf32> to vector<128x1xf32>
    %43 = arith.addf %37, %42 : vector<128x1xf32>
    %c0_18 = arith.constant 0 : index
    %c0_19 = arith.constant 0 : index
    %44 = vector.load %arg8[%c0_18, %c0_19] : memref<128x1xf32, #tpu.memory_space<vmem>>, vector<128x1xf32>
    tpu.vector_store %arg8[%c0_18, %c0_19], %43 {strides = array<i32>} : memref<128x1xf32, #tpu.memory_space<vmem>>, vector<128x1xf32>,
    %c0_20 = arith.constant 0 : index
    %c0_21 = arith.constant 0 : index
    %45 = vector.load %arg7[%c0_20, %c0_21] : memref<128x1xf32, #tpu.memory_space<vmem>>, vector<128x1xf32>
    tpu.vector_store %arg7[%c0_20, %c0_21], %32 {strides = array<i32>} : memref<128x1xf32, #tpu.memory_space<vmem>>, vector<128x1xf32>,
    %c0_22 = arith.constant 0 : index
    %c0_23 = arith.constant 0 : index
    %46 = vector.load %arg10[%c0_22, %c0_23] : memref<128x1xf32, #tpu.memory_space<vmem>>, vector<128x1xf32>
    %cst_24 = arith.constant 0.000000e+00 : f32
    %47 = vector.broadcast %cst_24 : f32 to vector<128x128xf32>
    %48 = arith.select %26, %5, %47 : vector<128x128xi1>, vector<128x128xf32>
    %cst_25 = arith.constant dense<0.000000e+00> : vector<128xf32>
    %49 = vector.multi_reduction <add>, %48, %cst_25 [1] : vector<128x128xf32> to vector<128xf32>
    %50 = vector.shape_cast %49 : vector<128xf32> to vector<128x1xf32>
    %51 = arith.addf %46, %50 : vector<128x1xf32>
    %c0_26 = arith.constant 0 : index
    %c0_27 = arith.constant 0 : index
    %52 = vector.load %arg10[%c0_26, %c0_27] : memref<128x1xf32, #tpu.memory_space<vmem>>, vector<128x1xf32>
    tpu.vector_store %arg10[%c0_26, %c0_27], %51 {strides = array<i32>} : memref<128x1xf32, #tpu.memory_space<vmem>>, vector<128x1xf32>,
    %c0_28 = arith.constant 0 : index
    %c0_29 = arith.constant 0 : index
    %53 = vector.load %arg9[%c0_28, %c0_29] : memref<128x1xf32, #tpu.memory_space<vmem>>, vector<128x1xf32>
    %cst_30 = arith.constant 1.000000e+00 : f32
    %cst_31 = arith.constant 0.000000e+00 : f32
    %54 = vector.broadcast %cst_30 : f32 to vector<128x128xf32>
    %55 = vector.broadcast %cst_31 : f32 to vector<128x128xf32>
    %56 = arith.select %26, %54, %55 : vector<128x128xi1>, vector<128x128xf32>
    %cst_32 = arith.constant dense<0.000000e+00> : vector<128xf32>
    %57 = vector.multi_reduction <add>, %56, %cst_32 [1] : vector<128x128xf32> to vector<128xf32>
    %58 = vector.shape_cast %57 : vector<128xf32> to vector<128x1xf32>
    %59 = arith.addf %53, %58 : vector<128x1xf32>
    %c0_33 = arith.constant 0 : index
    %c0_34 = arith.constant 0 : index
    %60 = vector.load %arg9[%c0_33, %c0_34] : memref<128x1xf32, #tpu.memory_space<vmem>>, vector<128x1xf32>
    tpu.vector_store %arg9[%c0_33, %c0_34], %59 {strides = array<i32>} : memref<128x1xf32, #tpu.memory_space<vmem>>, vector<128x1xf32>,
    %c0_i32_35 = arith.constant 0 : i32
    %61 = arith.cmpi eq, %arg1, %c0_i32_35 : i32
    %62 = arith.extui %61 : i1 to i32
    %c0_i32_36 = arith.constant 0 : i32
    %63 = arith.cmpi ne, %62, %c0_i32_36 : i32
    scf.if %63 {
      %c0_37 = arith.constant 0 : index
      %c0_38 = arith.constant 0 : index
      %64 = vector.load %arg7[%c0_37, %c0_38] : memref<128x1xf32, #tpu.memory_space<vmem>>, vector<128x1xf32>
      %c0_39 = arith.constant 0 : index
      %c0_40 = arith.constant 0 : index
      %65 = vector.load %arg8[%c0_39, %c0_40] : memref<128x1xf32, #tpu.memory_space<vmem>>, vector<128x1xf32>
      %66 = math.log %65 : vector<128x1xf32>
      %67 = arith.addf %64, %66 : vector<128x1xf32>
      %c0_41 = arith.constant 0 : index
      %c0_42 = arith.constant 0 : index
      %68 = vector.load %arg9[%c0_41, %c0_42] : memref<128x1xf32, #tpu.memory_space<vmem>>, vector<128x1xf32>
      %c0_43 = arith.constant 0 : index
      %c0_44 = arith.constant 0 : index
      %69 = vector.load %arg10[%c0_43, %c0_44] : memref<128x1xf32, #tpu.memory_space<vmem>>, vector<128x1xf32>
      %70 = arith.mulf %68, %67 : vector<128x1xf32>
      %71 = arith.subf %69, %70 : vector<128x1xf32>
      %cst_45 = arith.constant 1.000000e+00 : f32
      %72 = vector.broadcast %cst_45 : f32 to vector<128x1xf32>
      %73 = arith.maximumf %68, %72 : vector<128x1xf32>
      %74 = arith.divf %71, %73 : vector<128x1xf32>
      %cst_46 = arith.constant -1.000000e+00 : f32
      %75 = vector.broadcast %cst_46 : f32 to vector<128x1xf32>
      %76 = arith.mulf %75, %74 : vector<128x1xf32>
      %c16_i32_47 = arith.constant 16 : i32
      %77 = vector.broadcast %c16_i32_47 : i32 to vector<128x1xi32>
      %78 = arith.cmpi slt, %9, %77 : vector<128x1xi32>
      %cst_48 = arith.constant 0.000000e+00 : f32
      %79 = vector.broadcast %cst_48 : f32 to vector<128x1xf32>
      %80 = arith.select %78, %76, %79 : vector<128x1xi1>, vector<128x1xf32>
      %c0_49 = arith.constant 0 : index
      %c0_50 = arith.constant 0 : index
      %81 = vector.load %arg6[%c0_49, %c0_50] : memref<128x1xf32, #tpu.memory_space<vmem>>, vector<128x1xf32>
      tpu.vector_store %arg6[%c0_49, %c0_50], %80 {strides = array<i32>} : memref<128x1xf32, #tpu.memory_space<vmem>>, vector<128x1xf32>,
    } else {
    }
    return
  }
  func.func @transform_0(%arg0: i32, %arg1: i32) -> (i32, i32) {
    %c0_i32 = arith.constant 0 : i32
    %c0_i32_0 = arith.constant 0 : i32
    return %arg0, %c0_i32 : i32, i32
  }
  func.func @transform_1(%arg0: i32, %arg1: i32) -> (i32, i32) {
    %c0_i32 = arith.constant 0 : i32
    %c0_i32_0 = arith.constant 0 : i32
    return %c0_i32, %arg1 : i32, i32
  }
  func.func @transform_2(%arg0: i32, %arg1: i32) -> (i32, i32) {
    %c0_i32 = arith.constant 0 : i32
    %c0_i32_0 = arith.constant 0 : i32
    return %arg0, %c0_i32 : i32, i32
  }
  func.func @transform_3(%arg0: i32, %arg1: i32) -> (i32, i32) {
    %c0_i32 = arith.constant 0 : i32
    %c0_i32_0 = arith.constant 0 : i32
    return %c0_i32, %arg1 : i32, i32
  }
  func.func @transform_4(%arg0: i32, %arg1: i32) -> (i32, i32) {
    %c0_i32 = arith.constant 0 : i32
    %c0_i32_0 = arith.constant 0 : i32
    return %arg0, %c0_i32 : i32, i32
  }
}

</mosaic_0001>

<llo_original>
// kernel: tpu_custom_call.1
$region0: #{tpu_custom_call.1}
  #allocation0 [shape = 'u32[]', space=smem, size = 0x4, offset = 0x4, fixed_abs, tag = 'smem constant byte address 0x4 - core index']
  #allocation1 [shape = 'u32[144,128]{1,0:T(1,128)}', space=vmem, size = 0x12000, scoped, tag = 'internal scratch']
  #allocation2 [shape = 'f32[128,1]{1,0:T(8,128)}', space=vmem, size = 0x10000, scoped, tag = 'scratch operand']
  #allocation3 [shape = 'f32[128,1]{1,0:T(8,128)}', space=vmem, size = 0x10000, scoped, tag = 'scratch operand']
  #allocation4 [shape = 'f32[128,1]{1,0:T(8,128)}', space=vmem, size = 0x10000, scoped, tag = 'scratch operand']
  #allocation5 [shape = 'f32[128,1]{1,0:T(8,128)}', space=vmem, size = 0x10000, scoped, tag = 'scratch operand']
  %s0 = inlined_call_operand.vmem [shape: f32[128,128], index: 0, kind: input, shape index: {}]
  %s1 = inlined_call_operand.hbm [shape: f32[128,128], index: 1, kind: input, shape index: {}]
  %s2 = inlined_call_operand.vmem [shape: s32[128,1], index: 2, kind: input, shape index: {}]
  %s3 = inlined_call_operand.vmem [shape: s32[1,128], index: 3, kind: input, shape index: {}]
  %s4 = inlined_call_operand.vmem [shape: f32[128,1], index: 4, kind: output, shape index: {}]
  %s5 = sld [smem:[#allocation0]]
  $region38: #{tpu_custom_call.1} parent=0
    _
  %s7 = ssub.s32 1, %s5
  %s8 = scalar_select 0, %s7, %s5
  $region1: #{tpu_custom_call.1} parent=0
    #allocation6 [shape = 'u8[65536]{0}', space=vmem, size = 0x10000, scoped, tag = 'input window, operand 1, single buffered']
    #allocation7 [shape = 's32[1]{0}', space=sflag, size = 0x4, scoped, tag = 'scoped memory for tpu_custom_call.1']
    %9 = vsyncpa [#allocation7], 0
    // Predicated region
    $region2: #{tpu_custom_call.1} parent=1 // pred_check
      _
    $region3: #{tpu_custom_call.1} parent=1 // pred_check_branch
      %11 = sbr.rel (0) target = $region5
    $region4: #{tpu_custom_call.1} parent=1 // pred_region
      _
    $region5: #{tpu_custom_call.1} parent=1 // pred_fallthru
      _
    // Predicated region
    $region6: #{tpu_custom_call.1} parent=1 // pred_check
      _
    $region7: #{tpu_custom_call.1} parent=1 // pred_check_branch
      %13 = sbr.rel (0) target = $region9
    $region8: #{tpu_custom_call.1} parent=1 // pred_region
      %s15 = ssub.s32 2048, 2048
      %16 = vsyncadd [#allocation7], %s15
      %s17 = sshll.u32 [#allocation6], 4
      %s18 = int_to_ptr.vmem [resolvable:$true] %s17
      %23 = dma.hbm_to_vmem [thread:$0]  %s1, 2048, %s18, [#allocation7], 128, 128, 8
    $region9: #{tpu_custom_call.1} parent=1 // pred_fallthru
      _
    // Predicated region
    $region10: #{tpu_custom_call.1} parent=1 // pred_check
      _
    $region11: #{tpu_custom_call.1} parent=1 // pred_check_branch
      %25 = sbr.rel (0) target = $region13
    $region12: #{tpu_custom_call.1} parent=1 // pred_region
      _
    $region13: #{tpu_custom_call.1} parent=1 // pred_fallthru
      _
    // Predicated region
    $region14: #{tpu_custom_call.1} parent=1 // pred_check
      _
    $region15: #{tpu_custom_call.1} parent=1 // pred_check_branch
      %27 = sbr.rel (0) target = $region17
    $region16: #{tpu_custom_call.1} parent=1 // pred_region
      _
    $region17: #{tpu_custom_call.1} parent=1 // pred_fallthru
      _
    // Predicated region
    $region18: #{tpu_custom_call.1} parent=1 // pred_check
      _
    $region19: #{tpu_custom_call.1} parent=1 // pred_check_branch
      %29 = sbr.rel (0) target = $region21
    $region20: #{tpu_custom_call.1} parent=1 // pred_region
      %30 = dma.done [#allocation7], 2048
    $region21: #{tpu_custom_call.1} parent=1 // pred_fallthru
      _
    %p31 = scmp.eq.s32.totalorder 0, 0
    // Predicated region
    $region22: #{tpu_custom_call.1} parent=1 // pred_check
      %p32 = pneg %p31
    $region23: #{tpu_custom_call.1} parent=1 // pred_check_branch
      %34 = sbr.rel (%p32) target = $region25
    $region24: #{tpu_custom_call.1} parent=1 // pred_region
      %vm35 = vcmask 7168
      %36 = vst.msk [vmem:[#allocation2] sm:$0xff] %vm35, -inf
      %37 = vst.msk [vmem:[#allocation2 + $0x8] sm:$0xff] %vm35, -inf
      %38 = vst.msk [vmem:[#allocation2 + $0x10] sm:$0xff] %vm35, -inf
      %39 = vst.msk [vmem:[#allocation2 + $0x18] sm:$0xff] %vm35, -inf
      %40 = vst.msk [vmem:[#allocation2 + $0x20] sm:$0xff] %vm35, -inf
      %41 = vst.msk [vmem:[#allocation2 + $0x28] sm:$0xff] %vm35, -inf
      %42 = vst.msk [vmem:[#allocation2 + $0x30] sm:$0xff] %vm35, -inf
      %43 = vst.msk [vmem:[#allocation2 + $0x38] sm:$0xff] %vm35, -inf
      %44 = vst.msk [vmem:[#allocation2 + $0x40] sm:$0xff] %vm35, -inf
      %45 = vst.msk [vmem:[#allocation2 + $0x48] sm:$0xff] %vm35, -inf
      %46 = vst.msk [vmem:[#allocation2 + $0x50] sm:$0xff] %vm35, -inf
      %47 = vst.msk [vmem:[#allocation2 + $0x58] sm:$0xff] %vm35, -inf
      %48 = vst.msk [vmem:[#allocation2 + $0x60] sm:$0xff] %vm35, -inf
      %49 = vst.msk [vmem:[#allocation2 + $0x68] sm:$0xff] %vm35, -inf
      %50 = vst.msk [vmem:[#allocation2 + $0x70] sm:$0xff] %vm35, -inf
      %51 = vst.msk [vmem:[#allocation2 + $0x78] sm:$0xff] %vm35, -inf
      %52 = vst.msk [vmem:[#allocation3] sm:$0xff] %vm35, 0.0
      %53 = vst.msk [vmem:[#allocation3 + $0x8] sm:$0xff] %vm35, 0.0
      %54 = vst.msk [vmem:[#allocation3 + $0x10] sm:$0xff] %vm35, 0.0
      %55 = vst.msk [vmem:[#allocation3 + $0x18] sm:$0xff] %vm35, 0.0
      %56 = vst.msk [vmem:[#allocation3 + $0x20] sm:$0xff] %vm35, 0.0
      %57 = vst.msk [vmem:[#allocation3 + $0x28] sm:$0xff] %vm35, 0.0
      %58 = vst.msk [vmem:[#allocation3 + $0x30] sm:$0xff] %vm35, 0.0
      %59 = vst.msk [vmem:[#allocation3 + $0x38] sm:$0xff] %vm35, 0.0
      %60 = vst.msk [vmem:[#allocation3 + $0x40] sm:$0xff] %vm35, 0.0
      %61 = vst.msk [vmem:[#allocation3 + $0x48] sm:$0xff] %vm35, 0.0
      %62 = vst.msk [vmem:[#allocation3 + $0x50] sm:$0xff] %vm35, 0.0
      %63 = vst.msk [vmem:[#allocation3 + $0x58] sm:$0xff] %vm35, 0.0
      %64 = vst.msk [vmem:[#allocation3 + $0x60] sm:$0xff] %vm35, 0.0
      %65 = vst.msk [vmem:[#allocation3 + $0x68] sm:$0xff] %vm35, 0.0
      %66 = vst.msk [vmem:[#allocation3 + $0x70] sm:$0xff] %vm35, 0.0
      %67 = vst.msk [vmem:[#allocation3 + $0x78] sm:$0xff] %vm35, 0.0
      %68 = vst.msk [vmem:[#allocation4] sm:$0xff] %vm35, 0.0
      %69 = vst.msk [vmem:[#allocation4 + $0x8] sm:$0xff] %vm35, 0.0
      %70 = vst.msk [vmem:[#allocation4 + $0x10] sm:$0xff] %vm35, 0.0
      %71 = vst.msk [vmem:[#allocation4 + $0x18] sm:$0xff] %vm35, 0.0
      %72 = vst.msk [vmem:[#allocation4 + $0x20] sm:$0xff] %vm35, 0.0
      %73 = vst.msk [vmem:[#allocation4 + $0x28] sm:$0xff] %vm35, 0.0
      %74 = vst.msk [vmem:[#allocation4 + $0x30] sm:$0xff] %vm35, 0.0
      %75 = vst.msk [vmem:[#allocation4 + $0x38] sm:$0xff] %vm35, 0.0
      %76 = vst.msk [vmem:[#allocation4 + $0x40] sm:$0xff] %vm35, 0.0
      %77 = vst.msk [vmem:[#allocation4 + $0x48] sm:$0xff] %vm35, 0.0
      %78 = vst.msk [vmem:[#allocation4 + $0x50] sm:$0xff] %vm35, 0.0
      %79 = vst.msk [vmem:[#allocation4 + $0x58] sm:$0xff] %vm35, 0.0
      %80 = vst.msk [vmem:[#allocation4 + $0x60] sm:$0xff] %vm35, 0.0
      %81 = vst.msk [vmem:[#allocation4 + $0x68] sm:$0xff] %vm35, 0.0
      %82 = vst.msk [vmem:[#allocation4 + $0x70] sm:$0xff] %vm35, 0.0
      %83 = vst.msk [vmem:[#allocation4 + $0x78] sm:$0xff] %vm35, 0.0
      %84 = vst.msk [vmem:[#allocation5] sm:$0xff] %vm35, 0.0
      %85 = vst.msk [vmem:[#allocation5 + $0x8] sm:$0xff] %vm35, 0.0
      %86 = vst.msk [vmem:[#allocation5 + $0x10] sm:$0xff] %vm35, 0.0
      %87 = vst.msk [vmem:[#allocation5 + $0x18] sm:$0xff] %vm35, 0.0
      %88 = vst.msk [vmem:[#allocation5 + $0x20] sm:$0xff] %vm35, 0.0
      %89 = vst.msk [vmem:[#allocation5 + $0x28] sm:$0xff] %vm35, 0.0
      %90 = vst.msk [vmem:[#allocation5 + $0x30] sm:$0xff] %vm35, 0.0
      %91 = vst.msk [vmem:[#allocation5 + $0x38] sm:$0xff] %vm35, 0.0
      %92 = vst.msk [vmem:[#allocation5 + $0x40] sm:$0xff] %vm35, 0.0
      %93 = vst.msk [vmem:[#allocation5 + $0x48] sm:$0xff] %vm35, 0.0
      %94 = vst.msk [vmem:[#allocation5 + $0x50] sm:$0xff] %vm35, 0.0
      %95 = vst.msk [vmem:[#allocation5 + $0x58] sm:$0xff] %vm35, 0.0
      %96 = vst.msk [vmem:[#allocation5 + $0x60] sm:$0xff] %vm35, 0.0
      %97 = vst.msk [vmem:[#allocation5 + $0x68] sm:$0xff] %vm35, 0.0
      %98 = vst.msk [vmem:[#allocation5 + $0x70] sm:$0xff] %vm35, 0.0
      %99 = vst.msk [vmem:[#allocation5 + $0x78] sm:$0xff] %vm35, 0.0
    $region25: #{tpu_custom_call.1} parent=1 // pred_fallthru
      _
    %v100 = vld [vmem:[%s0] sm:$0xff]
    %v101 = vld [vmem:[%s0 + $0x8] sm:$0xff]
    %v102 = vld [vmem:[%s0 + $0x10] sm:$0xff]
    %v103 = vld [vmem:[%s0 + $0x18] sm:$0xff]
    %v104 = vld [vmem:[%s0 + $0x20] sm:$0xff]
    %v105 = vld [vmem:[%s0 + $0x28] sm:$0xff]
    %v106 = vld [vmem:[%s0 + $0x30] sm:$0xff]
    %v107 = vld [vmem:[%s0 + $0x38] sm:$0xff]
    %v108 = vld [vmem:[%s0 + $0x40] sm:$0xff]
    %v109 = vld [vmem:[%s0 + $0x48] sm:$0xff]
    %v110 = vld [vmem:[%s0 + $0x50] sm:$0xff]
    %v111 = vld [vmem:[%s0 + $0x58] sm:$0xff]
    %v112 = vld [vmem:[%s0 + $0x60] sm:$0xff]
    %v113 = vld [vmem:[%s0 + $0x68] sm:$0xff]
    %v114 = vld [vmem:[%s0 + $0x70] sm:$0xff]
    %v115 = vld [vmem:[%s0 + $0x78] sm:$0xff]
    %v116 = vld [vmem:[#allocation6] sm:$0xff]
    %v117 = vld [vmem:[#allocation6 + $0x8] sm:$0xff]
    %v118 = vld [vmem:[#allocation6 + $0x10] sm:$0xff]
    %v119 = vld [vmem:[#allocation6 + $0x18] sm:$0xff]
    %v120 = vld [vmem:[#allocation6 + $0x20] sm:$0xff]
    %v121 = vld [vmem:[#allocation6 + $0x28] sm:$0xff]
    %v122 = vld [vmem:[#allocation6 + $0x30] sm:$0xff]
    %v123 = vld [vmem:[#allocation6 + $0x38] sm:$0xff]
    %v124 = vld [vmem:[#allocation6 + $0x40] sm:$0xff]
    %v125 = vld [vmem:[#allocation6 + $0x48] sm:$0xff]
    %v126 = vld [vmem:[#allocation6 + $0x50] sm:$0xff]
    %v127 = vld [vmem:[#allocation6 + $0x58] sm:$0xff]
    %v128 = vld [vmem:[#allocation6 + $0x60] sm:$0xff]
    %v129 = vld [vmem:[#allocation6 + $0x68] sm:$0xff]
    %v130 = vld [vmem:[#allocation6 + $0x70] sm:$0xff]
    %v131 = vld [vmem:[#allocation6 + $0x78] sm:$0xff]
    %132 = vmatprep.subr.mxu0 0.0
    %v133 = vand.u32 %v131, 4294901760
    %134 = vmatpush1.msra.mxu0 %v133
    %135 = vmatprep.subr.mxu0 0.0
    %v136 = vand.u32 %v130, 4294901760
    %137 = vmatpush1.msra.mxu0 %v136
    %138 = vmatprep.subr.mxu0 0.0
    %v139 = vand.u32 %v129, 4294901760
    %140 = vmatpush1.msra.mxu0 %v139
    %141 = vmatprep.subr.mxu0 0.0
    %v142 = vand.u32 %v128, 4294901760
    %143 = vmatpush1.msra.mxu0 %v142
    %144 = vmatprep.subr.mxu0 0.0
    %v145 = vand.u32 %v127, 4294901760
    %146 = vmatpush1.msra.mxu0 %v145
    %147 = vmatprep.subr.mxu0 0.0
    %v148 = vand.u32 %v126, 4294901760
    %149 = vmatpush1.msra.mxu0 %v148
    %150 = vmatprep.subr.mxu0 0.0
    %v151 = vand.u32 %v125, 4294901760
    %152 = vmatpush1.msra.mxu0 %v151
    %153 = vmatprep.subr.mxu0 0.0
    %v154 = vand.u32 %v124, 4294901760
    %155 = vmatpush1.msra.mxu0 %v154
    %156 = vmatprep.subr.mxu0 0.0
    %v157 = vand.u32 %v123, 4294901760
    %158 = vmatpush1.msra.mxu0 %v157
    %159 = vmatprep.subr.mxu0 0.0
    %v160 = vand.u32 %v122, 4294901760
    %161 = vmatpush1.msra.mxu0 %v160
    %162 = vmatprep.subr.mxu0 0.0
    %v163 = vand.u32 %v121, 4294901760
    %164 = vmatpush1.msra.mxu0 %v163
    %165 = vmatprep.subr.mxu0 0.0
    %v166 = vand.u32 %v120, 4294901760
    %167 = vmatpush1.msra.mxu0 %v166
    %168 = vmatprep.subr.mxu0 0.0
    %v169 = vand.u32 %v119, 4294901760
    %170 = vmatpush1.msra.mxu0 %v169
    %171 = vmatprep.subr.mxu0 0.0
    %v172 = vand.u32 %v118, 4294901760
    %173 = vmatpush1.msra.mxu0 %v172
    %174 = vmatprep.subr.mxu0 0.0
    %v175 = vand.u32 %v117, 4294901760
    %176 = vmatpush1.msra.mxu0 %v175
    %177 = vmatprep.subr.mxu0 0.0
    %v178 = vand.u32 %v116, 4294901760
    %179 = vmatpush1.msra.mxu0 %v178
    %180 = vmatprep.subr.mxu0 0.0
    %181 = vmatpush2.msra.mxu0 0.0
    %182 = vmatprep.subr.mxu0 0.0
    %183 = vmatpush2.msra.mxu0 0.0
    %184 = vmatprep.subr.mxu0 0.0
    %185 = vmatpush2.msra.mxu0 0.0
    %186 = vmatprep.subr.mxu0 0.0
    %187 = vmatpush2.msra.mxu0 0.0
    %188 = vmatprep.subr.mxu0 0.0
    %189 = vmatpush2.msra.mxu0 0.0
    %190 = vmatprep.subr.mxu0 0.0
    %191 = vmatpush2.msra.mxu0 0.0
    %192 = vmatprep.subr.mxu0 0.0
    %193 = vmatpush2.msra.mxu0 0.0
    %194 = vmatprep.subr.mxu0 0.0
    %195 = vmatpush2.msra.mxu0 0.0
    %196 = vmatprep.subr.mxu0 0.0
    %197 = vmatpush2.msra.mxu0 0.0
    %198 = vmatprep.subr.mxu0 0.0
    %199 = vmatpush2.msra.mxu0 0.0
    %200 = vmatprep.subr.mxu0 0.0
    %201 = vmatpush2.msra.mxu0 0.0
    %202 = vmatprep.subr.mxu0 0.0
    %203 = vmatpush2.msra.mxu0 0.0
    %204 = vmatprep.subr.mxu0 0.0
    %205 = vmatpush2.msra.mxu0 0.0
    %206 = vmatprep.subr.mxu0 0.0
    %207 = vmatpush2.msra.mxu0 0.0
    %208 = vmatprep.subr.mxu0 0.0
    %209 = vmatpush2.msra.mxu0 0.0
    %210 = vmatprep.subr.mxu0 0.0
    %211 = vmatpush2.msra.mxu0 0.0
    %212 = vmatprep.mubr.f32.mxu0 0.0
    %v213 = vand.u32 %v100, 4294901760
    %v214 = vsub.f32 %v100, %v213
    %v215 = vand.u32 %v214, 4294901760
    %v216 = vsub.f32 %v214, %v215
    %v217 = vand.u32 %v216, 4294901760
    %218 = vmatmul.mubr.f32.gmra.mxu0 %v217
    %v219 = vpop.f32.mrf.mxu0
    %v220 = vadd.f32 0.0, %v219
    %v221 = vpop.f32.mrf.mxu0
    %222 = vmatprep.mubr.f32.mxu0 0.0
    %v223 = vand.u32 %v101, 4294901760
    %v224 = vsub.f32 %v101, %v223
    %v225 = vand.u32 %v224, 4294901760
    %v226 = vsub.f32 %v224, %v225
    %v227 = vand.u32 %v226, 4294901760
    %228 = vmatmul.mubr.f32.gmra.mxu0 %v227
    %v229 = vpop.f32.mrf.mxu0
    %v230 = vadd.f32 0.0, %v229
    %v231 = vpop.f32.mrf.mxu0
    %232 = vmatprep.mubr.f32.mxu0 0.0
    %v233 = vand.u32 %v102, 4294901760
    %v234 = vsub.f32 %v102, %v233
    %v235 = vand.u32 %v234, 4294901760
    %v236 = vsub.f32 %v234, %v235
    %v237 = vand.u32 %v236, 4294901760
    %238 = vmatmul.mubr.f32.gmra.mxu0 %v237
    %v239 = vpop.f32.mrf.mxu0
    %v240 = vadd.f32 0.0, %v239
    %v241 = vpop.f32.mrf.mxu0
    %242 = vmatprep.mubr.f32.mxu0 0.0
    %v243 = vand.u32 %v103, 4294901760
    %v244 = vsub.f32 %v103, %v243
    %v245 = vand.u32 %v244, 4294901760
    %v246 = vsub.f32 %v244, %v245
    %v247 = vand.u32 %v246, 4294901760
    %248 = vmatmul.mubr.f32.gmra.mxu0 %v247
    %v249 = vpop.f32.mrf.mxu0
    %v250 = vadd.f32 0.0, %v249
    %v251 = vpop.f32.mrf.mxu0
    %252 = vmatprep.mubr.f32.mxu0 0.0
    %v253 = vand.u32 %v104, 4294901760
    %v254 = vsub.f32 %v104, %v253
    %v255 = vand.u32 %v254, 4294901760
    %v256 = vsub.f32 %v254, %v255
    %v257 = vand.u32 %v256, 4294901760
    %258 = vmatmul.mubr.f32.gmra.mxu0 %v257
    %v259 = vpop.f32.mrf.mxu0
    %v260 = vadd.f32 0.0, %v259
    %v261 = vpop.f32.mrf.mxu0
    %262 = vmatprep.mubr.f32.mxu0 0.0
    %v263 = vand.u32 %v105, 4294901760
    %v264 = vsub.f32 %v105, %v263
    %v265 = vand.u32 %v264, 4294901760
    %v266 = vsub.f32 %v264, %v265
    %v267 = vand.u32 %v266, 4294901760
    %268 = vmatmul.mubr.f32.gmra.mxu0 %v267
    %v269 = vpop.f32.mrf.mxu0
    %v270 = vadd.f32 0.0, %v269
    %v271 = vpop.f32.mrf.mxu0
    %272 = vmatprep.mubr.f32.mxu0 0.0
    %v273 = vand.u32 %v106, 4294901760
    %v274 = vsub.f32 %v106, %v273
    %v275 = vand.u32 %v274, 4294901760
    %v276 = vsub.f32 %v274, %v275
    %v277 = vand.u32 %v276, 4294901760
    %278 = vmatmul.mubr.f32.gmra.mxu0 %v277
    %v279 = vpop.f32.mrf.mxu0
    %v280 = vadd.f32 0.0, %v279
    %v281 = vpop.f32.mrf.mxu0
    %282 = vmatprep.mubr.f32.mxu0 0.0
    %v283 = vand.u32 %v107, 4294901760
    %v284 = vsub.f32 %v107, %v283
    %v285 = vand.u32 %v284, 4294901760
    %v286 = vsub.f32 %v284, %v285
    %v287 = vand.u32 %v286, 4294901760
    %288 = vmatmul.mubr.f32.gmra.mxu0 %v287
    %v289 = vpop.f32.mrf.mxu0
    %v290 = vadd.f32 0.0, %v289
    %v291 = vpop.f32.mrf.mxu0
    %292 = vmatprep.mubr.f32.mxu0 0.0
    %v293 = vand.u32 %v108, 4294901760
    %v294 = vsub.f32 %v108, %v293
    %v295 = vand.u32 %v294, 4294901760
    %v296 = vsub.f32 %v294, %v295
    %v297 = vand.u32 %v296, 4294901760
    %298 = vmatmul.mubr.f32.gmra.mxu0 %v297
    %v299 = vpop.f32.mrf.mxu0
    %v300 = vadd.f32 0.0, %v299
    %v301 = vpop.f32.mrf.mxu0
    %302 = vmatprep.mubr.f32.mxu0 0.0
    %v303 = vand.u32 %v109, 4294901760
    %v304 = vsub.f32 %v109, %v303
    %v305 = vand.u32 %v304, 4294901760
    %v306 = vsub.f32 %v304, %v305
    %v307 = vand.u32 %v306, 4294901760
    %308 = vmatmul.mubr.f32.gmra.mxu0 %v307
    %v309 = vpop.f32.mrf.mxu0
    %v310 = vadd.f32 0.0, %v309
    %v311 = vpop.f32.mrf.mxu0
    %312 = vmatprep.mubr.f32.mxu0 0.0
    %v313 = vand.u32 %v110, 4294901760
    %v314 = vsub.f32 %v110, %v313
    %v315 = vand.u32 %v314, 4294901760
    %v316 = vsub.f32 %v314, %v315
    %v317 = vand.u32 %v316, 4294901760
    %318 = vmatmul.mubr.f32.gmra.mxu0 %v317
    %v319 = vpop.f32.mrf.mxu0
    %v320 = vadd.f32 0.0, %v319
    %v321 = vpop.f32.mrf.mxu0
    %322 = vmatprep.mubr.f32.mxu0 0.0
    %v323 = vand.u32 %v111, 4294901760
    %v324 = vsub.f32 %v111, %v323
    %v325 = vand.u32 %v324, 4294901760
    %v326 = vsub.f32 %v324, %v325
    %v327 = vand.u32 %v326, 4294901760
    %328 = vmatmul.mubr.f32.gmra.mxu0 %v327
    %v329 = vpop.f32.mrf.mxu0
    %v330 = vadd.f32 0.0, %v329
    %v331 = vpop.f32.mrf.mxu0
    %332 = vmatprep.mubr.f32.mxu0 0.0
    %v333 = vand.u32 %v112, 4294901760
    %v334 = vsub.f32 %v112, %v333
    %v335 = vand.u32 %v334, 4294901760
    %v336 = vsub.f32 %v334, %v335
    %v337 = vand.u32 %v336, 4294901760
    %338 = vmatmul.mubr.f32.gmra.mxu0 %v337
    %v339 = vpop.f32.mrf.mxu0
    %v340 = vadd.f32 0.0, %v339
    %v341 = vpop.f32.mrf.mxu0
    %342 = vmatprep.mubr.f32.mxu0 0.0
    %v343 = vand.u32 %v113, 4294901760
    %v344 = vsub.f32 %v113, %v343
    %v345 = vand.u32 %v344, 4294901760
    %v346 = vsub.f32 %v344, %v345
    %v347 = vand.u32 %v346, 4294901760
    %348 = vmatmul.mubr.f32.gmra.mxu0 %v347
    %v349 = vpop.f32.mrf.mxu0
    %v350 = vadd.f32 0.0, %v349
    %v351 = vpop.f32.mrf.mxu0
    %352 = vmatprep.mubr.f32.mxu0 0.0
    %v353 = vand.u32 %v114, 4294901760
    %v354 = vsub.f32 %v114, %v353
    %v355 = vand.u32 %v354, 4294901760
    %v356 = vsub.f32 %v354, %v355
    %v357 = vand.u32 %v356, 4294901760
    %358 = vmatmul.mubr.f32.gmra.mxu0 %v357
    %v359 = vpop.f32.mrf.mxu0
    %v360 = vadd.f32 0.0, %v359
    %v361 = vpop.f32.mrf.mxu0
    %362 = vmatprep.mubr.f32.mxu0 0.0
    %v363 = vand.u32 %v115, 4294901760
    %v364 = vsub.f32 %v115, %v363
    %v365 = vand.u32 %v364, 4294901760
    %v366 = vsub.f32 %v364, %v365
    %v367 = vand.u32 %v366, 4294901760
    %368 = vmatmul.mubr.f32.gmra.mxu0 %v367
    %v369 = vpop.f32.mrf.mxu0
    %v370 = vadd.f32 0.0, %v369
    %v371 = vpop.f32.mrf.mxu0
    %372 = vdwg.mxu0
    %373 = vmatprep.subr.mxu0 0.0
    %v374 = vand.u32 %v131, 4294901760
    %v375 = vsub.f32 %v131, %v374
    %v376 = vand.u32 %v375, 4294901760
    %v377 = vsub.f32 %v375, %v376
    %v378 = vand.u32 %v377, 4294901760
    %379 = vmatpush1.msra.mxu0 %v378
    %380 = vmatprep.subr.mxu0 0.0
    %v381 = vand.u32 %v130, 4294901760
    %v382 = vsub.f32 %v130, %v381
    %v383 = vand.u32 %v382, 4294901760
    %v384 = vsub.f32 %v382, %v383
    %v385 = vand.u32 %v384, 4294901760
    %386 = vmatpush1.msra.mxu0 %v385
    %387 = vmatprep.subr.mxu0 0.0
    %v388 = vand.u32 %v129, 4294901760
    %v389 = vsub.f32 %v129, %v388
    %v390 = vand.u32 %v389, 4294901760
    %v391 = vsub.f32 %v389, %v390
    %v392 = vand.u32 %v391, 4294901760
    %393 = vmatpush1.msra.mxu0 %v392
    %394 = vmatprep.subr.mxu0 0.0
    %v395 = vand.u32 %v128, 4294901760
    %v396 = vsub.f32 %v128, %v395
    %v397 = vand.u32 %v396, 4294901760
    %v398 = vsub.f32 %v396, %v397
    %v399 = vand.u32 %v398, 4294901760
    %400 = vmatpush1.msra.mxu0 %v399
    %401 = vmatprep.subr.mxu0 0.0
    %v402 = vand.u32 %v127, 4294901760
    %v403 = vsub.f32 %v127, %v402
    %v404 = vand.u32 %v403, 4294901760
    %v405 = vsub.f32 %v403, %v404
    %v406 = vand.u32 %v405, 4294901760
    %407 = vmatpush1.msra.mxu0 %v406
    %408 = vmatprep.subr.mxu0 0.0
    %v409 = vand.u32 %v126, 4294901760
    %v410 = vsub.f32 %v126, %v409
    %v411 = vand.u32 %v410, 4294901760
    %v412 = vsub.f32 %v410, %v411
    %v413 = vand.u32 %v412, 4294901760
    %414 = vmatpush1.msra.mxu0 %v413
    %415 = vmatprep.subr.mxu0 0.0
    %v416 = vand.u32 %v125, 4294901760
    %v417 = vsub.f32 %v125, %v416
    %v418 = vand.u32 %v417, 4294901760
    %v419 = vsub.f32 %v417, %v418
    %v420 = vand.u32 %v419, 4294901760
    %421 = vmatpush1.msra.mxu0 %v420
    %422 = vmatprep.subr.mxu0 0.0
    %v423 = vand.u32 %v124, 4294901760
    %v424 = vsub.f32 %v124, %v423
    %v425 = vand.u32 %v424, 4294901760
    %v426 = vsub.f32 %v424, %v425
    %v427 = vand.u32 %v426, 4294901760
    %428 = vmatpush1.msra.mxu0 %v427
    %429 = vmatprep.subr.mxu0 0.0
    %v430 = vand.u32 %v123, 4294901760
    %v431 = vsub.f32 %v123, %v430
    %v432 = vand.u32 %v431, 4294901760
    %v433 = vsub.f32 %v431, %v432
    %v434 = vand.u32 %v433, 4294901760
    %435 = vmatpush1.msra.mxu0 %v434
    %436 = vmatprep.subr.mxu0 0.0
    %v437 = vand.u32 %v122, 4294901760
    %v438 = vsub.f32 %v122, %v437
    %v439 = vand.u32 %v438, 4294901760
    %v440 = vsub.f32 %v438, %v439
    %v441 = vand.u32 %v440, 4294901760
    %442 = vmatpush1.msra.mxu0 %v441
    %443 = vmatprep.subr.mxu0 0.0
    %v444 = vand.u32 %v121, 4294901760
    %v445 = vsub.f32 %v121, %v444
    %v446 = vand.u32 %v445, 4294901760
    %v447 = vsub.f32 %v445, %v446
    %v448 = vand.u32 %v447, 4294901760
    %449 = vmatpush1.msra.mxu0 %v448
    %450 = vmatprep.subr.mxu0 0.0
    %v451 = vand.u32 %v120, 4294901760
    %v452 = vsub.f32 %v120, %v451
    %v453 = vand.u32 %v452, 4294901760
    %v454 = vsub.f32 %v452, %v453
    %v455 = vand.u32 %v454, 4294901760
    %456 = vmatpush1.msra.mxu0 %v455
    %457 = vmatprep.subr.mxu0 0.0
    %v458 = vand.u32 %v119, 4294901760
    %v459 = vsub.f32 %v119, %v458
    %v460 = vand.u32 %v459, 4294901760
    %v461 = vsub.f32 %v459, %v460
    %v462 = vand.u32 %v461, 4294901760
    %463 = vmatpush1.msra.mxu0 %v462
    %464 = vmatprep.subr.mxu0 0.0
    %v465 = vand.u32 %v118, 4294901760
    %v466 = vsub.f32 %v118, %v465
    %v467 = vand.u32 %v466, 4294901760
    %v468 = vsub.f32 %v466, %v467
    %v469 = vand.u32 %v468, 4294901760
    %470 = vmatpush1.msra.mxu0 %v469
    %471 = vmatprep.subr.mxu0 0.0
    %v472 = vand.u32 %v117, 4294901760
    %v473 = vsub.f32 %v117, %v472
    %v474 = vand.u32 %v473, 4294901760
    %v475 = vsub.f32 %v473, %v474
    %v476 = vand.u32 %v475, 4294901760
    %477 = vmatpush1.msra.mxu0 %v476
    %478 = vmatprep.subr.mxu0 0.0
    %v479 = vand.u32 %v116, 4294901760
    %v480 = vsub.f32 %v116, %v479
    %v481 = vand.u32 %v480, 4294901760
    %v482 = vsub.f32 %v480, %v481
    %v483 = vand.u32 %v482, 4294901760
    %484 = vmatpush1.msra.mxu0 %v483
    %485 = vmatprep.subr.mxu0 0.0
    %486 = vmatpush2.msra.mxu0 0.0
    %487 = vmatprep.subr.mxu0 0.0
    %488 = vmatpush2.msra.mxu0 0.0
    %489 = vmatprep.subr.mxu0 0.0
    %490 = vmatpush2.msra.mxu0 0.0
    %491 = vmatprep.subr.mxu0 0.0
    %492 = vmatpush2.msra.mxu0 0.0
    %493 = vmatprep.subr.mxu0 0.0
    %494 = vmatpush2.msra.mxu0 0.0
    %495 = vmatprep.subr.mxu0 0.0
    %496 = vmatpush2.msra.mxu0 0.0
    %497 = vmatprep.subr.mxu0 0.0
    %498 = vmatpush2.msra.mxu0 0.0
    %499 = vmatprep.subr.mxu0 0.0
    %500 = vmatpush2.msra.mxu0 0.0
    %501 = vmatprep.subr.mxu0 0.0
    %502 = vmatpush2.msra.mxu0 0.0
    %503 = vmatprep.subr.mxu0 0.0
    %504 = vmatpush2.msra.mxu0 0.0
    %505 = vmatprep.subr.mxu0 0.0
    %506 = vmatpush2.msra.mxu0 0.0
    %507 = vmatprep.subr.mxu0 0.0
    %508 = vmatpush2.msra.mxu0 0.0
    %509 = vmatprep.subr.mxu0 0.0
    %510 = vmatpush2.msra.mxu0 0.0
    %511 = vmatprep.subr.mxu0 0.0
    %512 = vmatpush2.msra.mxu0 0.0
    %513 = vmatprep.subr.mxu0 0.0
    %514 = vmatpush2.msra.mxu0 0.0
    %515 = vmatprep.subr.mxu0 0.0
    %516 = vmatpush2.msra.mxu0 0.0
    %517 = vmatprep.mubr.f32.mxu0 0.0
    %v518 = vand.u32 %v100, 4294901760
    %519 = vmatmul.mubr.f32.gmra.mxu0 %v518
    %v520 = vpop.f32.mrf.mxu0
    %v521 = vadd.f32 %v220, %v520
    %v522 = vpop.f32.mrf.mxu0
    %523 = vmatprep.mubr.f32.mxu0 0.0
    %v524 = vand.u32 %v101, 4294901760
    %525 = vmatmul.mubr.f32.gmra.mxu0 %v524
    %v526 = vpop.f32.mrf.mxu0
    %v527 = vadd.f32 %v230, %v526
    %v528 = vpop.f32.mrf.mxu0
    %529 = vmatprep.mubr.f32.mxu0 0.0
    %v530 = vand.u32 %v102, 4294901760
    %531 = vmatmul.mubr.f32.gmra.mxu0 %v530
    %v532 = vpop.f32.mrf.mxu0
    %v533 = vadd.f32 %v240, %v532
    %v534 = vpop.f32.mrf.mxu0
    %535 = vmatprep.mubr.f32.mxu0 0.0
    %v536 = vand.u32 %v103, 4294901760
    %537 = vmatmul.mubr.f32.gmra.mxu0 %v536
    %v538 = vpop.f32.mrf.mxu0
    %v539 = vadd.f32 %v250, %v538
    %v540 = vpop.f32.mrf.mxu0
    %541 = vmatprep.mubr.f32.mxu0 0.0
    %v542 = vand.u32 %v104, 4294901760
    %543 = vmatmul.mubr.f32.gmra.mxu0 %v542
    %v544 = vpop.f32.mrf.mxu0
    %v545 = vadd.f32 %v260, %v544
    %v546 = vpop.f32.mrf.mxu0
    %547 = vmatprep.mubr.f32.mxu0 0.0
    %v548 = vand.u32 %v105, 4294901760
    %549 = vmatmul.mubr.f32.gmra.mxu0 %v548
    %v550 = vpop.f32.mrf.mxu0
    %v551 = vadd.f32 %v270, %v550
    %v552 = vpop.f32.mrf.mxu0
    %553 = vmatprep.mubr.f32.mxu0 0.0
    %v554 = vand.u32 %v106, 4294901760
    %555 = vmatmul.mubr.f32.gmra.mxu0 %v554
    %v556 = vpop.f32.mrf.mxu0
    %v557 = vadd.f32 %v280, %v556
    %v558 = vpop.f32.mrf.mxu0
    %559 = vmatprep.mubr.f32.mxu0 0.0
    %v560 = vand.u32 %v107, 4294901760
    %561 = vmatmul.mubr.f32.gmra.mxu0 %v560
    %v562 = vpop.f32.mrf.mxu0
    %v563 = vadd.f32 %v290, %v562
    %v564 = vpop.f32.mrf.mxu0
    %565 = vmatprep.mubr.f32.mxu0 0.0
    %v566 = vand.u32 %v108, 4294901760
    %567 = vmatmul.mubr.f32.gmra.mxu0 %v566
    %v568 = vpop.f32.mrf.mxu0
    %v569 = vadd.f32 %v300, %v568
    %v570 = vpop.f32.mrf.mxu0
    %571 = vmatprep.mubr.f32.mxu0 0.0
    %v572 = vand.u32 %v109, 4294901760
    %573 = vmatmul.mubr.f32.gmra.mxu0 %v572
    %v574 = vpop.f32.mrf.mxu0
    %v575 = vadd.f32 %v310, %v574
    %v576 = vpop.f32.mrf.mxu0
    %577 = vmatprep.mubr.f32.mxu0 0.0
    %v578 = vand.u32 %v110, 4294901760
    %579 = vmatmul.mubr.f32.gmra.mxu0 %v578
    %v580 = vpop.f32.mrf.mxu0
    %v581 = vadd.f32 %v320, %v580
    %v582 = vpop.f32.mrf.mxu0
    %583 = vmatprep.mubr.f32.mxu0 0.0
    %v584 = vand.u32 %v111, 4294901760
    %585 = vmatmul.mubr.f32.gmra.mxu0 %v584
    %v586 = vpop.f32.mrf.mxu0
    %v587 = vadd.f32 %v330, %v586
    %v588 = vpop.f32.mrf.mxu0
    %589 = vmatprep.mubr.f32.mxu0 0.0
    %v590 = vand.u32 %v112, 4294901760
    %591 = vmatmul.mubr.f32.gmra.mxu0 %v590
    %v592 = vpop.f32.mrf.mxu0
    %v593 = vadd.f32 %v340, %v592
    %v594 = vpop.f32.mrf.mxu0
    %595 = vmatprep.mubr.f32.mxu0 0.0
    %v596 = vand.u32 %v113, 4294901760
    %597 = vmatmul.mubr.f32.gmra.mxu0 %v596
    %v598 = vpop.f32.mrf.mxu0
    %v599 = vadd.f32 %v350, %v598
    %v600 = vpop.f32.mrf.mxu0
    %601 = vmatprep.mubr.f32.mxu0 0.0
    %v602 = vand.u32 %v114, 4294901760
    %603 = vmatmul.mubr.f32.gmra.mxu0 %v602
    %v604 = vpop.f32.mrf.mxu0
    %v605 = vadd.f32 %v360, %v604
    %v606 = vpop.f32.mrf.mxu0
    %607 = vmatprep.mubr.f32.mxu0 0.0
    %v608 = vand.u32 %v115, 4294901760
    %609 = vmatmul.mubr.f32.gmra.mxu0 %v608
    %v610 = vpop.f32.mrf.mxu0
    %v611 = vadd.f32 %v370, %v610
    %v612 = vpop.f32.mrf.mxu0
    %613 = vdwg.mxu0
    %614 = vmatprep.subr.mxu0 0.0
    %v615 = vand.u32 %v131, 4294901760
    %v616 = vsub.f32 %v131, %v615
    %617 = vmatpush1.msra.mxu0 %v616
    %618 = vmatprep.subr.mxu0 0.0
    %v619 = vand.u32 %v130, 4294901760
    %v620 = vsub.f32 %v130, %v619
    %621 = vmatpush1.msra.mxu0 %v620
    %622 = vmatprep.subr.mxu0 0.0
    %v623 = vand.u32 %v129, 4294901760
    %v624 = vsub.f32 %v129, %v623
    %625 = vmatpush1.msra.mxu0 %v624
    %626 = vmatprep.subr.mxu0 0.0
    %v627 = vand.u32 %v128, 4294901760
    %v628 = vsub.f32 %v128, %v627
    %629 = vmatpush1.msra.mxu0 %v628
    %630 = vmatprep.subr.mxu0 0.0
    %v631 = vand.u32 %v127, 4294901760
    %v632 = vsub.f32 %v127, %v631
    %633 = vmatpush1.msra.mxu0 %v632
    %634 = vmatprep.subr.mxu0 0.0
    %v635 = vand.u32 %v126, 4294901760
    %v636 = vsub.f32 %v126, %v635
    %637 = vmatpush1.msra.mxu0 %v636
    %638 = vmatprep.subr.mxu0 0.0
    %v639 = vand.u32 %v125, 4294901760
    %v640 = vsub.f32 %v125, %v639
    %641 = vmatpush1.msra.mxu0 %v640
    %642 = vmatprep.subr.mxu0 0.0
    %v643 = vand.u32 %v124, 4294901760
    %v644 = vsub.f32 %v124, %v643
    %645 = vmatpush1.msra.mxu0 %v644
    %646 = vmatprep.subr.mxu0 0.0
    %v647 = vand.u32 %v123, 4294901760
    %v648 = vsub.f32 %v123, %v647
    %649 = vmatpush1.msra.mxu0 %v648
    %650 = vmatprep.subr.mxu0 0.0
    %v651 = vand.u32 %v122, 4294901760
    %v652 = vsub.f32 %v122, %v651
    %653 = vmatpush1.msra.mxu0 %v652
    %654 = vmatprep.subr.mxu0 0.0
    %v655 = vand.u32 %v121, 4294901760
    %v656 = vsub.f32 %v121, %v655
    %657 = vmatpush1.msra.mxu0 %v656
    %658 = vmatprep.subr.mxu0 0.0
    %v659 = vand.u32 %v120, 4294901760
    %v660 = vsub.f32 %v120, %v659
    %661 = vmatpush1.msra.mxu0 %v660
    %662 = vmatprep.subr.mxu0 0.0
    %v663 = vand.u32 %v119, 4294901760
    %v664 = vsub.f32 %v119, %v663
    %665 = vmatpush1.msra.mxu0 %v664
    %666 = vmatprep.subr.mxu0 0.0
    %v667 = vand.u32 %v118, 4294901760
    %v668 = vsub.f32 %v118, %v667
    %669 = vmatpush1.msra.mxu0 %v668
    %670 = vmatprep.subr.mxu0 0.0
    %v671 = vand.u32 %v117, 4294901760
    %v672 = vsub.f32 %v117, %v671
    %673 = vmatpush1.msra.mxu0 %v672
    %674 = vmatprep.subr.mxu0 0.0
    %v675 = vand.u32 %v116, 4294901760
    %v676 = vsub.f32 %v116, %v675
    %677 = vmatpush1.msra.mxu0 %v676
    %678 = vmatprep.subr.mxu0 0.0
    %679 = vmatpush2.msra.mxu0 0.0
    %680 = vmatprep.subr.mxu0 0.0
    %681 = vmatpush2.msra.mxu0 0.0
    %682 = vmatprep.subr.mxu0 0.0
    %683 = vmatpush2.msra.mxu0 0.0
    %684 = vmatprep.subr.mxu0 0.0
    %685 = vmatpush2.msra.mxu0 0.0
    %686 = vmatprep.subr.mxu0 0.0
    %687 = vmatpush2.msra.mxu0 0.0
    %688 = vmatprep.subr.mxu0 0.0
    %689 = vmatpush2.msra.mxu0 0.0
    %690 = vmatprep.subr.mxu0 0.0
    %691 = vmatpush2.msra.mxu0 0.0
    %692 = vmatprep.subr.mxu0 0.0
    %693 = vmatpush2.msra.mxu0 0.0
    %694 = vmatprep.subr.mxu0 0.0
    %695 = vmatpush2.msra.mxu0 0.0
    %696 = vmatprep.subr.mxu0 0.0
    %697 = vmatpush2.msra.mxu0 0.0
    %698 = vmatprep.subr.mxu0 0.0
    %699 = vmatpush2.msra.mxu0 0.0
    %700 = vmatprep.subr.mxu0 0.0
    %701 = vmatpush2.msra.mxu0 0.0
    %702 = vmatprep.subr.mxu0 0.0
    %703 = vmatpush2.msra.mxu0 0.0
    %704 = vmatprep.subr.mxu0 0.0
    %705 = vmatpush2.msra.mxu0 0.0
    %706 = vmatprep.subr.mxu0 0.0
    %707 = vmatpush2.msra.mxu0 0.0
    %708 = vmatprep.subr.mxu0 0.0
    %709 = vmatpush2.msra.mxu0 0.0
    %710 = vmatprep.mubr.f32.mxu0 0.0
    %v711 = vand.u32 %v100, 4294901760
    %v712 = vsub.f32 %v100, %v711
    %713 = vmatmul.mubr.f32.gmra.mxu0 %v712
    %v714 = vpop.f32.mrf.mxu0
    %v715 = vadd.f32 %v521, %v714
    %v716 = vpop.f32.mrf.mxu0
    %717 = vmatprep.mubr.f32.mxu0 0.0
    %v718 = vand.u32 %v101, 4294901760
    %v719 = vsub.f32 %v101, %v718
    %720 = vmatmul.mubr.f32.gmra.mxu0 %v719
    %v721 = vpop.f32.mrf.mxu0
    %v722 = vadd.f32 %v527, %v721
    %v723 = vpop.f32.mrf.mxu0
    %724 = vmatprep.mubr.f32.mxu0 0.0
    %v725 = vand.u32 %v102, 4294901760
    %v726 = vsub.f32 %v102, %v725
    %727 = vmatmul.mubr.f32.gmra.mxu0 %v726
    %v728 = vpop.f32.mrf.mxu0
    %v729 = vadd.f32 %v533, %v728
    %v730 = vpop.f32.mrf.mxu0
    %731 = vmatprep.mubr.f32.mxu0 0.0
    %v732 = vand.u32 %v103, 4294901760
    %v733 = vsub.f32 %v103, %v732
    %734 = vmatmul.mubr.f32.gmra.mxu0 %v733
    %v735 = vpop.f32.mrf.mxu0
    %v736 = vadd.f32 %v539, %v735
    %v737 = vpop.f32.mrf.mxu0
    %738 = vmatprep.mubr.f32.mxu0 0.0
    %v739 = vand.u32 %v104, 4294901760
    %v740 = vsub.f32 %v104, %v739
    %741 = vmatmul.mubr.f32.gmra.mxu0 %v740
    %v742 = vpop.f32.mrf.mxu0
    %v743 = vadd.f32 %v545, %v742
    %v744 = vpop.f32.mrf.mxu0
    %745 = vmatprep.mubr.f32.mxu0 0.0
    %v746 = vand.u32 %v105, 4294901760
    %v747 = vsub.f32 %v105, %v746
    %748 = vmatmul.mubr.f32.gmra.mxu0 %v747
    %v749 = vpop.f32.mrf.mxu0
    %v750 = vadd.f32 %v551, %v749
    %v751 = vpop.f32.mrf.mxu0
    %752 = vmatprep.mubr.f32.mxu0 0.0
    %v753 = vand.u32 %v106, 4294901760
    %v754 = vsub.f32 %v106, %v753
    %755 = vmatmul.mubr.f32.gmra.mxu0 %v754
    %v756 = vpop.f32.mrf.mxu0
    %v757 = vadd.f32 %v557, %v756
    %v758 = vpop.f32.mrf.mxu0
    %759 = vmatprep.mubr.f32.mxu0 0.0
    %v760 = vand.u32 %v107, 4294901760
    %v761 = vsub.f32 %v107, %v760
    %762 = vmatmul.mubr.f32.gmra.mxu0 %v761
    %v763 = vpop.f32.mrf.mxu0
    %v764 = vadd.f32 %v563, %v763
    %v765 = vpop.f32.mrf.mxu0
    %766 = vmatprep.mubr.f32.mxu0 0.0
    %v767 = vand.u32 %v108, 4294901760
    %v768 = vsub.f32 %v108, %v767
    %769 = vmatmul.mubr.f32.gmra.mxu0 %v768
    %v770 = vpop.f32.mrf.mxu0
    %v771 = vadd.f32 %v569, %v770
    %v772 = vpop.f32.mrf.mxu0
    %773 = vmatprep.mubr.f32.mxu0 0.0
    %v774 = vand.u32 %v109, 4294901760
    %v775 = vsub.f32 %v109, %v774
    %776 = vmatmul.mubr.f32.gmra.mxu0 %v775
    %v777 = vpop.f32.mrf.mxu0
    %v778 = vadd.f32 %v575, %v777
    %v779 = vpop.f32.mrf.mxu0
    %780 = vmatprep.mubr.f32.mxu0 0.0
    %v781 = vand.u32 %v110, 4294901760
    %v782 = vsub.f32 %v110, %v781
    %783 = vmatmul.mubr.f32.gmra.mxu0 %v782
    %v784 = vpop.f32.mrf.mxu0
    %v785 = vadd.f32 %v581, %v784
    %v786 = vpop.f32.mrf.mxu0
    %787 = vmatprep.mubr.f32.mxu0 0.0
    %v788 = vand.u32 %v111, 4294901760
    %v789 = vsub.f32 %v111, %v788
    %790 = vmatmul.mubr.f32.gmra.mxu0 %v789
    %v791 = vpop.f32.mrf.mxu0
    %v792 = vadd.f32 %v587, %v791
    %v793 = vpop.f32.mrf.mxu0
    %794 = vmatprep.mubr.f32.mxu0 0.0
    %v795 = vand.u32 %v112, 4294901760
    %v796 = vsub.f32 %v112, %v795
    %797 = vmatmul.mubr.f32.gmra.mxu0 %v796
    %v798 = vpop.f32.mrf.mxu0
    %v799 = vadd.f32 %v593, %v798
    %v800 = vpop.f32.mrf.mxu0
    %801 = vmatprep.mubr.f32.mxu0 0.0
    %v802 = vand.u32 %v113, 4294901760
    %v803 = vsub.f32 %v113, %v802
    %804 = vmatmul.mubr.f32.gmra.mxu0 %v803
    %v805 = vpop.f32.mrf.mxu0
    %v806 = vadd.f32 %v599, %v805
    %v807 = vpop.f32.mrf.mxu0
    %808 = vmatprep.mubr.f32.mxu0 0.0
    %v809 = vand.u32 %v114, 4294901760
    %v810 = vsub.f32 %v114, %v809
    %811 = vmatmul.mubr.f32.gmra.mxu0 %v810
    %v812 = vpop.f32.mrf.mxu0
    %v813 = vadd.f32 %v605, %v812
    %v814 = vpop.f32.mrf.mxu0
    %815 = vmatprep.mubr.f32.mxu0 0.0
    %v816 = vand.u32 %v115, 4294901760
    %v817 = vsub.f32 %v115, %v816
    %818 = vmatmul.mubr.f32.gmra.mxu0 %v817
    %v819 = vpop.f32.mrf.mxu0
    %v820 = vadd.f32 %v611, %v819
    %v821 = vpop.f32.mrf.mxu0
    %822 = vdwg.mxu0
    %823 = vmatprep.subr.mxu0 0.0
    %v824 = vand.u32 %v131, 4294901760
    %825 = vmatpush1.msra.mxu0 %v824
    %826 = vmatprep.subr.mxu0 0.0
    %v827 = vand.u32 %v130, 4294901760
    %828 = vmatpush1.msra.mxu0 %v827
    %829 = vmatprep.subr.mxu0 0.0
    %v830 = vand.u32 %v129, 4294901760
    %831 = vmatpush1.msra.mxu0 %v830
    %832 = vmatprep.subr.mxu0 0.0
    %v833 = vand.u32 %v128, 4294901760
    %834 = vmatpush1.msra.mxu0 %v833
    %835 = vmatprep.subr.mxu0 0.0
    %v836 = vand.u32 %v127, 4294901760
    %837 = vmatpush1.msra.mxu0 %v836
    %838 = vmatprep.subr.mxu0 0.0
    %v839 = vand.u32 %v126, 4294901760
    %840 = vmatpush1.msra.mxu0 %v839
    %841 = vmatprep.subr.mxu0 0.0
    %v842 = vand.u32 %v125, 4294901760
    %843 = vmatpush1.msra.mxu0 %v842
    %844 = vmatprep.subr.mxu0 0.0
    %v845 = vand.u32 %v124, 4294901760
    %846 = vmatpush1.msra.mxu0 %v845
    %847 = vmatprep.subr.mxu0 0.0
    %v848 = vand.u32 %v123, 4294901760
    %849 = vmatpush1.msra.mxu0 %v848
    %850 = vmatprep.subr.mxu0 0.0
    %v851 = vand.u32 %v122, 4294901760
    %852 = vmatpush1.msra.mxu0 %v851
    %853 = vmatprep.subr.mxu0 0.0
    %v854 = vand.u32 %v121, 4294901760
    %855 = vmatpush1.msra.mxu0 %v854
    %856 = vmatprep.subr.mxu0 0.0
    %v857 = vand.u32 %v120, 4294901760
    %858 = vmatpush1.msra.mxu0 %v857
    %859 = vmatprep.subr.mxu0 0.0
    %v860 = vand.u32 %v119, 4294901760
    %861 = vmatpush1.msra.mxu0 %v860
    %862 = vmatprep.subr.mxu0 0.0
    %v863 = vand.u32 %v118, 4294901760
    %864 = vmatpush1.msra.mxu0 %v863
    %865 = vmatprep.subr.mxu0 0.0
    %v866 = vand.u32 %v117, 4294901760
    %867 = vmatpush1.msra.mxu0 %v866
    %868 = vmatprep.subr.mxu0 0.0
    %v869 = vand.u32 %v116, 4294901760
    %870 = vmatpush1.msra.mxu0 %v869
    %871 = vmatprep.subr.mxu0 0.0
    %872 = vmatpush2.msra.mxu0 0.0
    %873 = vmatprep.subr.mxu0 0.0
    %874 = vmatpush2.msra.mxu0 0.0
    %875 = vmatprep.subr.mxu0 0.0
    %876 = vmatpush2.msra.mxu0 0.0
    %877 = vmatprep.subr.mxu0 0.0
    %878 = vmatpush2.msra.mxu0 0.0
    %879 = vmatprep.subr.mxu0 0.0
    %880 = vmatpush2.msra.mxu0 0.0
    %881 = vmatprep.subr.mxu0 0.0
    %882 = vmatpush2.msra.mxu0 0.0
    %883 = vmatprep.subr.mxu0 0.0
    %884 = vmatpush2.msra.mxu0 0.0
    %885 = vmatprep.subr.mxu0 0.0
    %886 = vmatpush2.msra.mxu0 0.0
    %887 = vmatprep.subr.mxu0 0.0
    %888 = vmatpush2.msra.mxu0 0.0
    %889 = vmatprep.subr.mxu0 0.0
    %890 = vmatpush2.msra.mxu0 0.0
    %891 = vmatprep.subr.mxu0 0.0
    %892 = vmatpush2.msra.mxu0 0.0
    %893 = vmatprep.subr.mxu0 0.0
    %894 = vmatpush2.msra.mxu0 0.0
    %895 = vmatprep.subr.mxu0 0.0
    %896 = vmatpush2.msra.mxu0 0.0
    %897 = vmatprep.subr.mxu0 0.0
    %898 = vmatpush2.msra.mxu0 0.0
    %899 = vmatprep.subr.mxu0 0.0
    %900 = vmatpush2.msra.mxu0 0.0
    %901 = vmatprep.subr.mxu0 0.0
    %902 = vmatpush2.msra.mxu0 0.0
    %903 = vmatprep.mubr.f32.mxu0 0.0
    %v904 = vand.u32 %v100, 4294901760
    %v905 = vsub.f32 %v100, %v904
    %v906 = vand.u32 %v905, 4294901760
    %907 = vmatmul.mubr.f32.gmra.mxu0 %v906
    %v908 = vpop.f32.mrf.mxu0
    %v909 = vadd.f32 %v715, %v908
    %v910 = vpop.f32.mrf.mxu0
    %911 = vmatprep.mubr.f32.mxu0 0.0
    %v912 = vand.u32 %v101, 4294901760
    %v913 = vsub.f32 %v101, %v912
    %v914 = vand.u32 %v913, 4294901760
    %915 = vmatmul.mubr.f32.gmra.mxu0 %v914
    %v916 = vpop.f32.mrf.mxu0
    %v917 = vadd.f32 %v722, %v916
    %v918 = vpop.f32.mrf.mxu0
    %919 = vmatprep.mubr.f32.mxu0 0.0
    %v920 = vand.u32 %v102, 4294901760
    %v921 = vsub.f32 %v102, %v920
    %v922 = vand.u32 %v921, 4294901760
    %923 = vmatmul.mubr.f32.gmra.mxu0 %v922
    %v924 = vpop.f32.mrf.mxu0
    %v925 = vadd.f32 %v729, %v924
    %v926 = vpop.f32.mrf.mxu0
    %927 = vmatprep.mubr.f32.mxu0 0.0
    %v928 = vand.u32 %v103, 4294901760
    %v929 = vsub.f32 %v103, %v928
    %v930 = vand.u32 %v929, 4294901760
    %931 = vmatmul.mubr.f32.gmra.mxu0 %v930
    %v932 = vpop.f32.mrf.mxu0
    %v933 = vadd.f32 %v736, %v932
    %v934 = vpop.f32.mrf.mxu0
    %935 = vmatprep.mubr.f32.mxu0 0.0
    %v936 = vand.u32 %v104, 4294901760
    %v937 = vsub.f32 %v104, %v936
    %v938 = vand.u32 %v937, 4294901760
    %939 = vmatmul.mubr.f32.gmra.mxu0 %v938
    %v940 = vpop.f32.mrf.mxu0
    %v941 = vadd.f32 %v743, %v940
    %v942 = vpop.f32.mrf.mxu0
    %943 = vmatprep.mubr.f32.mxu0 0.0
    %v944 = vand.u32 %v105, 4294901760
    %v945 = vsub.f32 %v105, %v944
    %v946 = vand.u32 %v945, 4294901760
    %947 = vmatmul.mubr.f32.gmra.mxu0 %v946
    %v948 = vpop.f32.mrf.mxu0
    %v949 = vadd.f32 %v750, %v948
    %v950 = vpop.f32.mrf.mxu0
    %951 = vmatprep.mubr.f32.mxu0 0.0
    %v952 = vand.u32 %v106, 4294901760
    %v953 = vsub.f32 %v106, %v952
    %v954 = vand.u32 %v953, 4294901760
    %955 = vmatmul.mubr.f32.gmra.mxu0 %v954
    %v956 = vpop.f32.mrf.mxu0
    %v957 = vadd.f32 %v757, %v956
    %v958 = vpop.f32.mrf.mxu0
    %959 = vmatprep.mubr.f32.mxu0 0.0
    %v960 = vand.u32 %v107, 4294901760
    %v961 = vsub.f32 %v107, %v960
    %v962 = vand.u32 %v961, 4294901760
    %963 = vmatmul.mubr.f32.gmra.mxu0 %v962
    %v964 = vpop.f32.mrf.mxu0
    %v965 = vadd.f32 %v764, %v964
    %v966 = vpop.f32.mrf.mxu0
    %967 = vmatprep.mubr.f32.mxu0 0.0
    %v968 = vand.u32 %v108, 4294901760
    %v969 = vsub.f32 %v108, %v968
    %v970 = vand.u32 %v969, 4294901760
    %971 = vmatmul.mubr.f32.gmra.mxu0 %v970
    %v972 = vpop.f32.mrf.mxu0
    %v973 = vadd.f32 %v771, %v972
    %v974 = vpop.f32.mrf.mxu0
    %975 = vmatprep.mubr.f32.mxu0 0.0
    %v976 = vand.u32 %v109, 4294901760
    %v977 = vsub.f32 %v109, %v976
    %v978 = vand.u32 %v977, 4294901760
    %979 = vmatmul.mubr.f32.gmra.mxu0 %v978
    %v980 = vpop.f32.mrf.mxu0
    %v981 = vadd.f32 %v778, %v980
    %v982 = vpop.f32.mrf.mxu0
    %983 = vmatprep.mubr.f32.mxu0 0.0
    %v984 = vand.u32 %v110, 4294901760
    %v985 = vsub.f32 %v110, %v984
    %v986 = vand.u32 %v985, 4294901760
    %987 = vmatmul.mubr.f32.gmra.mxu0 %v986
    %v988 = vpop.f32.mrf.mxu0
    %v989 = vadd.f32 %v785, %v988
    %v990 = vpop.f32.mrf.mxu0
    %991 = vmatprep.mubr.f32.mxu0 0.0
    %v992 = vand.u32 %v111, 4294901760
    %v993 = vsub.f32 %v111, %v992
    %v994 = vand.u32 %v993, 4294901760
    %995 = vmatmul.mubr.f32.gmra.mxu0 %v994
    %v996 = vpop.f32.mrf.mxu0
    %v997 = vadd.f32 %v792, %v996
    %v998 = vpop.f32.mrf.mxu0
    %999 = vmatprep.mubr.f32.mxu0 0.0
    %v1000 = vand.u32 %v112, 4294901760
    %v1001 = vsub.f32 %v112, %v1000
    %v1002 = vand.u32 %v1001, 4294901760
    %1003 = vmatmul.mubr.f32.gmra.mxu0 %v1002
    %v1004 = vpop.f32.mrf.mxu0
    %v1005 = vadd.f32 %v799, %v1004
    %v1006 = vpop.f32.mrf.mxu0
    %1007 = vmatprep.mubr.f32.mxu0 0.0
    %v1008 = vand.u32 %v113, 4294901760
    %v1009 = vsub.f32 %v113, %v1008
    %v1010 = vand.u32 %v1009, 4294901760
    %1011 = vmatmul.mubr.f32.gmra.mxu0 %v1010
    %v1012 = vpop.f32.mrf.mxu0
    %v1013 = vadd.f32 %v806, %v1012
    %v1014 = vpop.f32.mrf.mxu0
    %1015 = vmatprep.mubr.f32.mxu0 0.0
    %v1016 = vand.u32 %v114, 4294901760
    %v1017 = vsub.f32 %v114, %v1016
    %v1018 = vand.u32 %v1017, 4294901760
    %1019 = vmatmul.mubr.f32.gmra.mxu0 %v1018
    %v1020 = vpop.f32.mrf.mxu0
    %v1021 = vadd.f32 %v813, %v1020
    %v1022 = vpop.f32.mrf.mxu0
    %1023 = vmatprep.mubr.f32.mxu0 0.0
    %v1024 = vand.u32 %v115, 4294901760
    %v1025 = vsub.f32 %v115, %v1024
    %v1026 = vand.u32 %v1025, 4294901760
    %1027 = vmatmul.mubr.f32.gmra.mxu0 %v1026
    %v1028 = vpop.f32.mrf.mxu0
    %v1029 = vadd.f32 %v820, %v1028
    %v1030 = vpop.f32.mrf.mxu0
    %1031 = vdwg.mxu0
    %1032 = vmatprep.subr.mxu0 0.0
    %v1033 = vand.u32 %v131, 4294901760
    %v1034 = vsub.f32 %v131, %v1033
    %v1035 = vand.u32 %v1034, 4294901760
    %1036 = vmatpush1.msra.mxu0 %v1035
    %1037 = vmatprep.subr.mxu0 0.0
    %v1038 = vand.u32 %v130, 4294901760
    %v1039 = vsub.f32 %v130, %v1038
    %v1040 = vand.u32 %v1039, 4294901760
    %1041 = vmatpush1.msra.mxu0 %v1040
    %1042 = vmatprep.subr.mxu0 0.0
    %v1043 = vand.u32 %v129, 4294901760
    %v1044 = vsub.f32 %v129, %v1043
    %v1045 = vand.u32 %v1044, 4294901760
    %1046 = vmatpush1.msra.mxu0 %v1045
    %1047 = vmatprep.subr.mxu0 0.0
    %v1048 = vand.u32 %v128, 4294901760
    %v1049 = vsub.f32 %v128, %v1048
    %v1050 = vand.u32 %v1049, 4294901760
    %1051 = vmatpush1.msra.mxu0 %v1050
    %1052 = vmatprep.subr.mxu0 0.0
    %v1053 = vand.u32 %v127, 4294901760
    %v1054 = vsub.f32 %v127, %v1053
    %v1055 = vand.u32 %v1054, 4294901760
    %1056 = vmatpush1.msra.mxu0 %v1055
    %1057 = vmatprep.subr.mxu0 0.0
    %v1058 = vand.u32 %v126, 4294901760
    %v1059 = vsub.f32 %v126, %v1058
    %v1060 = vand.u32 %v1059, 4294901760
    %1061 = vmatpush1.msra.mxu0 %v1060
    %1062 = vmatprep.subr.mxu0 0.0
    %v1063 = vand.u32 %v125, 4294901760
    %v1064 = vsub.f32 %v125, %v1063
    %v1065 = vand.u32 %v1064, 4294901760
    %1066 = vmatpush1.msra.mxu0 %v1065
    %1067 = vmatprep.subr.mxu0 0.0
    %v1068 = vand.u32 %v124, 4294901760
    %v1069 = vsub.f32 %v124, %v1068
    %v1070 = vand.u32 %v1069, 4294901760
    %1071 = vmatpush1.msra.mxu0 %v1070
    %1072 = vmatprep.subr.mxu0 0.0
    %v1073 = vand.u32 %v123, 4294901760
    %v1074 = vsub.f32 %v123, %v1073
    %v1075 = vand.u32 %v1074, 4294901760
    %1076 = vmatpush1.msra.mxu0 %v1075
    %1077 = vmatprep.subr.mxu0 0.0
    %v1078 = vand.u32 %v122, 4294901760
    %v1079 = vsub.f32 %v122, %v1078
    %v1080 = vand.u32 %v1079, 4294901760
    %1081 = vmatpush1.msra.mxu0 %v1080
    %1082 = vmatprep.subr.mxu0 0.0
    %v1083 = vand.u32 %v121, 4294901760
    %v1084 = vsub.f32 %v121, %v1083
    %v1085 = vand.u32 %v1084, 4294901760
    %1086 = vmatpush1.msra.mxu0 %v1085
    %1087 = vmatprep.subr.mxu0 0.0
    %v1088 = vand.u32 %v120, 4294901760
    %v1089 = vsub.f32 %v120, %v1088
    %v1090 = vand.u32 %v1089, 4294901760
    %1091 = vmatpush1.msra.mxu0 %v1090
    %1092 = vmatprep.subr.mxu0 0.0
    %v1093 = vand.u32 %v119, 4294901760
    %v1094 = vsub.f32 %v119, %v1093
    %v1095 = vand.u32 %v1094, 4294901760
    %1096 = vmatpush1.msra.mxu0 %v1095
    %1097 = vmatprep.subr.mxu0 0.0
    %v1098 = vand.u32 %v118, 4294901760
    %v1099 = vsub.f32 %v118, %v1098
    %v1100 = vand.u32 %v1099, 4294901760
    %1101 = vmatpush1.msra.mxu0 %v1100
    %1102 = vmatprep.subr.mxu0 0.0
    %v1103 = vand.u32 %v117, 4294901760
    %v1104 = vsub.f32 %v117, %v1103
    %v1105 = vand.u32 %v1104, 4294901760
    %1106 = vmatpush1.msra.mxu0 %v1105
    %1107 = vmatprep.subr.mxu0 0.0
    %v1108 = vand.u32 %v116, 4294901760
    %v1109 = vsub.f32 %v116, %v1108
    %v1110 = vand.u32 %v1109, 4294901760
    %1111 = vmatpush1.msra.mxu0 %v1110
    %1112 = vmatprep.subr.mxu0 0.0
    %1113 = vmatpush2.msra.mxu0 0.0
    %1114 = vmatprep.subr.mxu0 0.0
    %1115 = vmatpush2.msra.mxu0 0.0
    %1116 = vmatprep.subr.mxu0 0.0
    %1117 = vmatpush2.msra.mxu0 0.0
    %1118 = vmatprep.subr.mxu0 0.0
    %1119 = vmatpush2.msra.mxu0 0.0
    %1120 = vmatprep.subr.mxu0 0.0
    %1121 = vmatpush2.msra.mxu0 0.0
    %1122 = vmatprep.subr.mxu0 0.0
    %1123 = vmatpush2.msra.mxu0 0.0
    %1124 = vmatprep.subr.mxu0 0.0
    %1125 = vmatpush2.msra.mxu0 0.0
    %1126 = vmatprep.subr.mxu0 0.0
    %1127 = vmatpush2.msra.mxu0 0.0
    %1128 = vmatprep.subr.mxu0 0.0
    %1129 = vmatpush2.msra.mxu0 0.0
    %1130 = vmatprep.subr.mxu0 0.0
    %1131 = vmatpush2.msra.mxu0 0.0
    %1132 = vmatprep.subr.mxu0 0.0
    %1133 = vmatpush2.msra.mxu0 0.0
    %1134 = vmatprep.subr.mxu0 0.0
    %1135 = vmatpush2.msra.mxu0 0.0
    %1136 = vmatprep.subr.mxu0 0.0
    %1137 = vmatpush2.msra.mxu0 0.0
    %1138 = vmatprep.subr.mxu0 0.0
    %1139 = vmatpush2.msra.mxu0 0.0
    %1140 = vmatprep.subr.mxu0 0.0
    %1141 = vmatpush2.msra.mxu0 0.0
    %1142 = vmatprep.subr.mxu0 0.0
    %1143 = vmatpush2.msra.mxu0 0.0
    %1144 = vmatprep.mubr.f32.mxu0 0.0
    %v1145 = vand.u32 %v100, 4294901760
    %1146 = vmatmul.mubr.f32.gmra.mxu0 %v1145
    %v1147 = vpop.f32.mrf.mxu0
    %v1148 = vadd.f32 %v909, %v1147
    %v1149 = vpop.f32.mrf.mxu0
    %1150 = vmatprep.mubr.f32.mxu0 0.0
    %v1151 = vand.u32 %v101, 4294901760
    %1152 = vmatmul.mubr.f32.gmra.mxu0 %v1151
    %v1153 = vpop.f32.mrf.mxu0
    %v1154 = vadd.f32 %v917, %v1153
    %v1155 = vpop.f32.mrf.mxu0
    %1156 = vmatprep.mubr.f32.mxu0 0.0
    %v1157 = vand.u32 %v102, 4294901760
    %1158 = vmatmul.mubr.f32.gmra.mxu0 %v1157
    %v1159 = vpop.f32.mrf.mxu0
    %v1160 = vadd.f32 %v925, %v1159
    %v1161 = vpop.f32.mrf.mxu0
    %1162 = vmatprep.mubr.f32.mxu0 0.0
    %v1163 = vand.u32 %v103, 4294901760
    %1164 = vmatmul.mubr.f32.gmra.mxu0 %v1163
    %v1165 = vpop.f32.mrf.mxu0
    %v1166 = vadd.f32 %v933, %v1165
    %v1167 = vpop.f32.mrf.mxu0
    %1168 = vmatprep.mubr.f32.mxu0 0.0
    %v1169 = vand.u32 %v104, 4294901760
    %1170 = vmatmul.mubr.f32.gmra.mxu0 %v1169
    %v1171 = vpop.f32.mrf.mxu0
    %v1172 = vadd.f32 %v941, %v1171
    %v1173 = vpop.f32.mrf.mxu0
    %1174 = vmatprep.mubr.f32.mxu0 0.0
    %v1175 = vand.u32 %v105, 4294901760
    %1176 = vmatmul.mubr.f32.gmra.mxu0 %v1175
    %v1177 = vpop.f32.mrf.mxu0
    %v1178 = vadd.f32 %v949, %v1177
    %v1179 = vpop.f32.mrf.mxu0
    %1180 = vmatprep.mubr.f32.mxu0 0.0
    %v1181 = vand.u32 %v106, 4294901760
    %1182 = vmatmul.mubr.f32.gmra.mxu0 %v1181
    %v1183 = vpop.f32.mrf.mxu0
    %v1184 = vadd.f32 %v957, %v1183
    %v1185 = vpop.f32.mrf.mxu0
    %1186 = vmatprep.mubr.f32.mxu0 0.0
    %v1187 = vand.u32 %v107, 4294901760
    %1188 = vmatmul.mubr.f32.gmra.mxu0 %v1187
    %v1189 = vpop.f32.mrf.mxu0
    %v1190 = vadd.f32 %v965, %v1189
    %v1191 = vpop.f32.mrf.mxu0
    %1192 = vmatprep.mubr.f32.mxu0 0.0
    %v1193 = vand.u32 %v108, 4294901760
    %1194 = vmatmul.mubr.f32.gmra.mxu0 %v1193
    %v1195 = vpop.f32.mrf.mxu0
    %v1196 = vadd.f32 %v973, %v1195
    %v1197 = vpop.f32.mrf.mxu0
    %1198 = vmatprep.mubr.f32.mxu0 0.0
    %v1199 = vand.u32 %v109, 4294901760
    %1200 = vmatmul.mubr.f32.gmra.mxu0 %v1199
    %v1201 = vpop.f32.mrf.mxu0
    %v1202 = vadd.f32 %v981, %v1201
    %v1203 = vpop.f32.mrf.mxu0
    %1204 = vmatprep.mubr.f32.mxu0 0.0
    %v1205 = vand.u32 %v110, 4294901760
    %1206 = vmatmul.mubr.f32.gmra.mxu0 %v1205
    %v1207 = vpop.f32.mrf.mxu0
    %v1208 = vadd.f32 %v989, %v1207
    %v1209 = vpop.f32.mrf.mxu0
    %1210 = vmatprep.mubr.f32.mxu0 0.0
    %v1211 = vand.u32 %v111, 4294901760
    %1212 = vmatmul.mubr.f32.gmra.mxu0 %v1211
    %v1213 = vpop.f32.mrf.mxu0
    %v1214 = vadd.f32 %v997, %v1213
    %v1215 = vpop.f32.mrf.mxu0
    %1216 = vmatprep.mubr.f32.mxu0 0.0
    %v1217 = vand.u32 %v112, 4294901760
    %1218 = vmatmul.mubr.f32.gmra.mxu0 %v1217
    %v1219 = vpop.f32.mrf.mxu0
    %v1220 = vadd.f32 %v1005, %v1219
    %v1221 = vpop.f32.mrf.mxu0
    %1222 = vmatprep.mubr.f32.mxu0 0.0
    %v1223 = vand.u32 %v113, 4294901760
    %1224 = vmatmul.mubr.f32.gmra.mxu0 %v1223
    %v1225 = vpop.f32.mrf.mxu0
    %v1226 = vadd.f32 %v1013, %v1225
    %v1227 = vpop.f32.mrf.mxu0
    %1228 = vmatprep.mubr.f32.mxu0 0.0
    %v1229 = vand.u32 %v114, 4294901760
    %1230 = vmatmul.mubr.f32.gmra.mxu0 %v1229
    %v1231 = vpop.f32.mrf.mxu0
    %v1232 = vadd.f32 %v1021, %v1231
    %v1233 = vpop.f32.mrf.mxu0
    %1234 = vmatprep.mubr.f32.mxu0 0.0
    %v1235 = vand.u32 %v115, 4294901760
    %1236 = vmatmul.mubr.f32.gmra.mxu0 %v1235
    %v1237 = vpop.f32.mrf.mxu0
    %v1238 = vadd.f32 %v1029, %v1237
    %v1239 = vpop.f32.mrf.mxu0
    %1240 = vdwg.mxu0
    %1241 = vmatprep.subr.mxu0 0.0
    %v1242 = vand.u32 %v131, 4294901760
    %1243 = vmatpush1.msra.mxu0 %v1242
    %1244 = vmatprep.subr.mxu0 0.0
    %v1245 = vand.u32 %v130, 4294901760
    %1246 = vmatpush1.msra.mxu0 %v1245
    %1247 = vmatprep.subr.mxu0 0.0
    %v1248 = vand.u32 %v129, 4294901760
    %1249 = vmatpush1.msra.mxu0 %v1248
    %1250 = vmatprep.subr.mxu0 0.0
    %v1251 = vand.u32 %v128, 4294901760
    %1252 = vmatpush1.msra.mxu0 %v1251
    %1253 = vmatprep.subr.mxu0 0.0
    %v1254 = vand.u32 %v127, 4294901760
    %1255 = vmatpush1.msra.mxu0 %v1254
    %1256 = vmatprep.subr.mxu0 0.0
    %v1257 = vand.u32 %v126, 4294901760
    %1258 = vmatpush1.msra.mxu0 %v1257
    %1259 = vmatprep.subr.mxu0 0.0
    %v1260 = vand.u32 %v125, 4294901760
    %1261 = vmatpush1.msra.mxu0 %v1260
    %1262 = vmatprep.subr.mxu0 0.0
    %v1263 = vand.u32 %v124, 4294901760
    %1264 = vmatpush1.msra.mxu0 %v1263
    %1265 = vmatprep.subr.mxu0 0.0
    %v1266 = vand.u32 %v123, 4294901760
    %1267 = vmatpush1.msra.mxu0 %v1266
    %1268 = vmatprep.subr.mxu0 0.0
    %v1269 = vand.u32 %v122, 4294901760
    %1270 = vmatpush1.msra.mxu0 %v1269
    %1271 = vmatprep.subr.mxu0 0.0
    %v1272 = vand.u32 %v121, 4294901760
    %1273 = vmatpush1.msra.mxu0 %v1272
    %1274 = vmatprep.subr.mxu0 0.0
    %v1275 = vand.u32 %v120, 4294901760
    %1276 = vmatpush1.msra.mxu0 %v1275
    %1277 = vmatprep.subr.mxu0 0.0
    %v1278 = vand.u32 %v119, 4294901760
    %1279 = vmatpush1.msra.mxu0 %v1278
    %1280 = vmatprep.subr.mxu0 0.0
    %v1281 = vand.u32 %v118, 4294901760
    %1282 = vmatpush1.msra.mxu0 %v1281
    %1283 = vmatprep.subr.mxu0 0.0
    %v1284 = vand.u32 %v117, 4294901760
    %1285 = vmatpush1.msra.mxu0 %v1284
    %1286 = vmatprep.subr.mxu0 0.0
    %v1287 = vand.u32 %v116, 4294901760
    %1288 = vmatpush1.msra.mxu0 %v1287
    %1289 = vmatprep.subr.mxu0 0.0
    %1290 = vmatpush2.msra.mxu0 0.0
    %1291 = vmatprep.subr.mxu0 0.0
    %1292 = vmatpush2.msra.mxu0 0.0
    %1293 = vmatprep.subr.mxu0 0.0
    %1294 = vmatpush2.msra.mxu0 0.0
    %1295 = vmatprep.subr.mxu0 0.0
    %1296 = vmatpush2.msra.mxu0 0.0
    %1297 = vmatprep.subr.mxu0 0.0
    %1298 = vmatpush2.msra.mxu0 0.0
    %1299 = vmatprep.subr.mxu0 0.0
    %1300 = vmatpush2.msra.mxu0 0.0
    %1301 = vmatprep.subr.mxu0 0.0
    %1302 = vmatpush2.msra.mxu0 0.0
    %1303 = vmatprep.subr.mxu0 0.0
    %1304 = vmatpush2.msra.mxu0 0.0
    %1305 = vmatprep.subr.mxu0 0.0
    %1306 = vmatpush2.msra.mxu0 0.0
    %1307 = vmatprep.subr.mxu0 0.0
    %1308 = vmatpush2.msra.mxu0 0.0
    %1309 = vmatprep.subr.mxu0 0.0
    %1310 = vmatpush2.msra.mxu0 0.0
    %1311 = vmatprep.subr.mxu0 0.0
    %1312 = vmatpush2.msra.mxu0 0.0
    %1313 = vmatprep.subr.mxu0 0.0
    %1314 = vmatpush2.msra.mxu0 0.0
    %1315 = vmatprep.subr.mxu0 0.0
    %1316 = vmatpush2.msra.mxu0 0.0
    %1317 = vmatprep.subr.mxu0 0.0
    %1318 = vmatpush2.msra.mxu0 0.0
    %1319 = vmatprep.subr.mxu0 0.0
    %1320 = vmatpush2.msra.mxu0 0.0
    %1321 = vmatprep.mubr.f32.mxu0 0.0
    %v1322 = vand.u32 %v100, 4294901760
    %1323 = vmatmul.mubr.f32.gmra.mxu0 %v1322
    %v1324 = vpop.f32.mrf.mxu0
    %v1325 = vadd.f32 %v1148, %v1324
    %v1326 = vpop.f32.mrf.mxu0
    %1327 = vmatprep.mubr.f32.mxu0 0.0
    %v1328 = vand.u32 %v101, 4294901760
    %1329 = vmatmul.mubr.f32.gmra.mxu0 %v1328
    %v1330 = vpop.f32.mrf.mxu0
    %v1331 = vadd.f32 %v1154, %v1330
    %v1332 = vpop.f32.mrf.mxu0
    %1333 = vmatprep.mubr.f32.mxu0 0.0
    %v1334 = vand.u32 %v102, 4294901760
    %1335 = vmatmul.mubr.f32.gmra.mxu0 %v1334
    %v1336 = vpop.f32.mrf.mxu0
    %v1337 = vadd.f32 %v1160, %v1336
    %v1338 = vpop.f32.mrf.mxu0
    %1339 = vmatprep.mubr.f32.mxu0 0.0
    %v1340 = vand.u32 %v103, 4294901760
    %1341 = vmatmul.mubr.f32.gmra.mxu0 %v1340
    %v1342 = vpop.f32.mrf.mxu0
    %v1343 = vadd.f32 %v1166, %v1342
    %v1344 = vpop.f32.mrf.mxu0
    %1345 = vmatprep.mubr.f32.mxu0 0.0
    %v1346 = vand.u32 %v104, 4294901760
    %1347 = vmatmul.mubr.f32.gmra.mxu0 %v1346
    %v1348 = vpop.f32.mrf.mxu0
    %v1349 = vadd.f32 %v1172, %v1348
    %v1350 = vpop.f32.mrf.mxu0
    %1351 = vmatprep.mubr.f32.mxu0 0.0
    %v1352 = vand.u32 %v105, 4294901760
    %1353 = vmatmul.mubr.f32.gmra.mxu0 %v1352
    %v1354 = vpop.f32.mrf.mxu0
    %v1355 = vadd.f32 %v1178, %v1354
    %v1356 = vpop.f32.mrf.mxu0
    %1357 = vmatprep.mubr.f32.mxu0 0.0
    %v1358 = vand.u32 %v106, 4294901760
    %1359 = vmatmul.mubr.f32.gmra.mxu0 %v1358
    %v1360 = vpop.f32.mrf.mxu0
    %v1361 = vadd.f32 %v1184, %v1360
    %v1362 = vpop.f32.mrf.mxu0
    %1363 = vmatprep.mubr.f32.mxu0 0.0
    %v1364 = vand.u32 %v107, 4294901760
    %1365 = vmatmul.mubr.f32.gmra.mxu0 %v1364
    %v1366 = vpop.f32.mrf.mxu0
    %v1367 = vadd.f32 %v1190, %v1366
    %v1368 = vpop.f32.mrf.mxu0
    %1369 = vmatprep.mubr.f32.mxu0 0.0
    %v1370 = vand.u32 %v108, 4294901760
    %1371 = vmatmul.mubr.f32.gmra.mxu0 %v1370
    %v1372 = vpop.f32.mrf.mxu0
    %v1373 = vadd.f32 %v1196, %v1372
    %v1374 = vpop.f32.mrf.mxu0
    %1375 = vmatprep.mubr.f32.mxu0 0.0
    %v1376 = vand.u32 %v109, 4294901760
    %1377 = vmatmul.mubr.f32.gmra.mxu0 %v1376
    %v1378 = vpop.f32.mrf.mxu0
    %v1379 = vadd.f32 %v1202, %v1378
    %v1380 = vpop.f32.mrf.mxu0
    %1381 = vmatprep.mubr.f32.mxu0 0.0
    %v1382 = vand.u32 %v110, 4294901760
    %1383 = vmatmul.mubr.f32.gmra.mxu0 %v1382
    %v1384 = vpop.f32.mrf.mxu0
    %v1385 = vadd.f32 %v1208, %v1384
    %v1386 = vpop.f32.mrf.mxu0
    %1387 = vmatprep.mubr.f32.mxu0 0.0
    %v1388 = vand.u32 %v111, 4294901760
    %1389 = vmatmul.mubr.f32.gmra.mxu0 %v1388
    %v1390 = vpop.f32.mrf.mxu0
    %v1391 = vadd.f32 %v1214, %v1390
    %v1392 = vpop.f32.mrf.mxu0
    %1393 = vmatprep.mubr.f32.mxu0 0.0
    %v1394 = vand.u32 %v112, 4294901760
    %1395 = vmatmul.mubr.f32.gmra.mxu0 %v1394
    %v1396 = vpop.f32.mrf.mxu0
    %v1397 = vadd.f32 %v1220, %v1396
    %v1398 = vpop.f32.mrf.mxu0
    %1399 = vmatprep.mubr.f32.mxu0 0.0
    %v1400 = vand.u32 %v113, 4294901760
    %1401 = vmatmul.mubr.f32.gmra.mxu0 %v1400
    %v1402 = vpop.f32.mrf.mxu0
    %v1403 = vadd.f32 %v1226, %v1402
    %v1404 = vpop.f32.mrf.mxu0
    %1405 = vmatprep.mubr.f32.mxu0 0.0
    %v1406 = vand.u32 %v114, 4294901760
    %1407 = vmatmul.mubr.f32.gmra.mxu0 %v1406
    %v1408 = vpop.f32.mrf.mxu0
    %v1409 = vadd.f32 %v1232, %v1408
    %v1410 = vpop.f32.mrf.mxu0
    %1411 = vmatprep.mubr.f32.mxu0 0.0
    %v1412 = vand.u32 %v115, 4294901760
    %1413 = vmatmul.mubr.f32.gmra.mxu0 %v1412
    %v1414 = vpop.f32.mrf.mxu0
    %v1415 = vadd.f32 %v1238, %v1414
    %v1416 = vpop.f32.mrf.mxu0
    %1417 = vdwg.mxu0
    %s1418 = smul.u32 0, 128
    %v1419 = vlaneseq
    %v1420 = vshrl.u32 %v1419, 7
    %v1421 = vadd.s32 %v1420, 8
    %v1422 = vadd.s32 %v1420, 16
    %v1423 = vadd.s32 %v1420, 24
    %v1424 = vadd.s32 %v1420, 32
    %v1425 = vadd.s32 %v1420, 40
    %v1426 = vadd.s32 %v1420, 48
    %v1427 = vadd.s32 %v1420, 56
    %v1428 = vadd.s32 %v1420, 64
    %v1429 = vadd.s32 %v1420, 72
    %v1430 = vadd.s32 %v1420, 80
    %v1431 = vadd.s32 %v1420, 88
    %v1432 = vadd.s32 %v1420, 96
    %v1433 = vadd.s32 %v1420, 104
    %v1434 = vadd.s32 %v1420, 112
    %v1435 = vadd.s32 %v1420, 120
    %v1436 = vstv %s1418
    %v1437 = vadd.s32 %v1436, %v1420
    %v1438 = vadd.s32 %v1436, %v1421
    %v1439 = vadd.s32 %v1436, %v1422
    %v1440 = vadd.s32 %v1436, %v1423
    %v1441 = vadd.s32 %v1436, %v1424
    %v1442 = vadd.s32 %v1436, %v1425
    %v1443 = vadd.s32 %v1436, %v1426
    %v1444 = vadd.s32 %v1436, %v1427
    %v1445 = vadd.s32 %v1436, %v1428
    %v1446 = vadd.s32 %v1436, %v1429
    %v1447 = vadd.s32 %v1436, %v1430
    %v1448 = vadd.s32 %v1436, %v1431
    %v1449 = vadd.s32 %v1436, %v1432
    %v1450 = vadd.s32 %v1436, %v1433
    %v1451 = vadd.s32 %v1436, %v1434
    %v1452 = vadd.s32 %v1436, %v1435
    %s1453 = smul.u32 0, 128
    %v1454 = vlaneseq
    %v1455 = vand.u32 %v1454, 127
    %v1456 = vstv %s1453
    %v1457 = vadd.s32 %v1456, %v1455
    %vm1458 = vcmp.ne.s32.totalorder %v1457, %v1437
    %vm1459 = vcmp.ne.s32.totalorder %v1457, %v1438
    %vm1460 = vcmp.ne.s32.totalorder %v1457, %v1439
    %vm1461 = vcmp.ne.s32.totalorder %v1457, %v1440
    %vm1462 = vcmp.ne.s32.totalorder %v1457, %v1441
    %vm1463 = vcmp.ne.s32.totalorder %v1457, %v1442
    %vm1464 = vcmp.ne.s32.totalorder %v1457, %v1443
    %vm1465 = vcmp.ne.s32.totalorder %v1457, %v1444
    %vm1466 = vcmp.ne.s32.totalorder %v1457, %v1445
    %vm1467 = vcmp.ne.s32.totalorder %v1457, %v1446
    %vm1468 = vcmp.ne.s32.totalorder %v1457, %v1447
    %vm1469 = vcmp.ne.s32.totalorder %v1457, %v1448
    %vm1470 = vcmp.ne.s32.totalorder %v1457, %v1449
    %vm1471 = vcmp.ne.s32.totalorder %v1457, %v1450
    %vm1472 = vcmp.ne.s32.totalorder %v1457, %v1451
    %vm1473 = vcmp.ne.s32.totalorder %v1457, %v1452
    %vm1474 = vcmp.lt.s32.totalorder %v1457, 16
    %v1475 = vsel %vm1474, 1, 0
    %vm1476 = vcmp.eq.s32.totalorder %v1475, 1
    %vm1477 = vmand %vm1458, %vm1476
    %vm1478 = vmand %vm1459, %vm1476
    %vm1479 = vmand %vm1460, %vm1476
    %vm1480 = vmand %vm1461, %vm1476
    %vm1481 = vmand %vm1462, %vm1476
    %vm1482 = vmand %vm1463, %vm1476
    %vm1483 = vmand %vm1464, %vm1476
    %vm1484 = vmand %vm1465, %vm1476
    %vm1485 = vmand %vm1466, %vm1476
    %vm1486 = vmand %vm1467, %vm1476
    %vm1487 = vmand %vm1468, %vm1476
    %vm1488 = vmand %vm1469, %vm1476
    %vm1489 = vmand %vm1470, %vm1476
    %vm1490 = vmand %vm1471, %vm1476
    %vm1491 = vmand %vm1472, %vm1476
    %vm1492 = vmand %vm1473, %vm1476
    %v1493 = vld [vmem:[%s2] sm:$0xff]
    %v1494 = vld [vmem:[%s2 + $0x8] sm:$0xff]
    %v1495 = vld [vmem:[%s2 + $0x10] sm:$0xff]
    %v1496 = vld [vmem:[%s2 + $0x18] sm:$0xff]
    %v1497 = vld [vmem:[%s2 + $0x20] sm:$0xff]
    %v1498 = vld [vmem:[%s2 + $0x28] sm:$0xff]
    %v1499 = vld [vmem:[%s2 + $0x30] sm:$0xff]
    %v1500 = vld [vmem:[%s2 + $0x38] sm:$0xff]
    %v1501 = vld [vmem:[%s2 + $0x40] sm:$0xff]
    %v1502 = vld [vmem:[%s2 + $0x48] sm:$0xff]
    %v1503 = vld [vmem:[%s2 + $0x50] sm:$0xff]
    %v1504 = vld [vmem:[%s2 + $0x58] sm:$0xff]
    %v1505 = vld [vmem:[%s2 + $0x60] sm:$0xff]
    %v1506 = vld [vmem:[%s2 + $0x68] sm:$0xff]
    %v1507 = vld [vmem:[%s2 + $0x70] sm:$0xff]
    %v1508 = vld [vmem:[%s2 + $0x78] sm:$0xff]
    %v1509 = vld [vmem:[%s3] sm:$0x1]
    %1510 = vset.pattern.permute.xlu0 0
    %1511 = vperm.xlu0 %1510, %v1493
    %v1512 = vpop.permute.xlu0 %1511
    %1513 = vset.pattern.permute.xlu0 0
    %1514 = vperm.xlu0 %1513, %v1494
    %v1515 = vpop.permute.xlu0 %1514
    %1516 = vset.pattern.permute.xlu0 0
    %1517 = vperm.xlu0 %1516, %v1495
    %v1518 = vpop.permute.xlu0 %1517
    %1519 = vset.pattern.permute.xlu0 0
    %1520 = vperm.xlu0 %1519, %v1496
    %v1521 = vpop.permute.xlu0 %1520
    %1522 = vset.pattern.permute.xlu0 0
    %1523 = vperm.xlu0 %1522, %v1497
    %v1524 = vpop.permute.xlu0 %1523
    %1525 = vset.pattern.permute.xlu0 0
    %1526 = vperm.xlu0 %1525, %v1498
    %v1527 = vpop.permute.xlu0 %1526
    %1528 = vset.pattern.permute.xlu0 0
    %1529 = vperm.xlu0 %1528, %v1499
    %v1530 = vpop.permute.xlu0 %1529
    %1531 = vset.pattern.permute.xlu0 0
    %1532 = vperm.xlu0 %1531, %v1500
    %v1533 = vpop.permute.xlu0 %1532
    %1534 = vset.pattern.permute.xlu0 0
    %1535 = vperm.xlu0 %1534, %v1501
    %v1536 = vpop.permute.xlu0 %1535
    %1537 = vset.pattern.permute.xlu0 0
    %1538 = vperm.xlu0 %1537, %v1502
    %v1539 = vpop.permute.xlu0 %1538
    %1540 = vset.pattern.permute.xlu0 0
    %1541 = vperm.xlu0 %1540, %v1503
    %v1542 = vpop.permute.xlu0 %1541
    %1543 = vset.pattern.permute.xlu0 0
    %1544 = vperm.xlu0 %1543, %v1504
    %v1545 = vpop.permute.xlu0 %1544
    %1546 = vset.pattern.permute.xlu0 0
    %1547 = vperm.xlu0 %1546, %v1505
    %v1548 = vpop.permute.xlu0 %1547
    %1549 = vset.pattern.permute.xlu0 0
    %1550 = vperm.xlu0 %1549, %v1506
    %v1551 = vpop.permute.xlu0 %1550
    %1552 = vset.pattern.permute.xlu0 0
    %1553 = vperm.xlu0 %1552, %v1507
    %v1554 = vpop.permute.xlu0 %1553
    %1555 = vset.pattern.permute.xlu0 0
    %1556 = vperm.xlu0 %1555, %v1508
    %v1557 = vpop.permute.xlu0 %1556
    %v1558 = vlaneseq
    %v1559 = vshrl.u32 %v1558, 7
    %v1560 = vsub.s32 0, %v1559
    %v1561 = vrot.slane %v1509, %v1560
    %vm1562 = vcmp.eq.s32.totalorder %v1512, %v1561
    %vm1563 = vcmp.eq.s32.totalorder %v1515, %v1561
    %vm1564 = vcmp.eq.s32.totalorder %v1518, %v1561
    %vm1565 = vcmp.eq.s32.totalorder %v1521, %v1561
    %vm1566 = vcmp.eq.s32.totalorder %v1524, %v1561
    %vm1567 = vcmp.eq.s32.totalorder %v1527, %v1561
    %vm1568 = vcmp.eq.s32.totalorder %v1530, %v1561
    %vm1569 = vcmp.eq.s32.totalorder %v1533, %v1561
    %vm1570 = vcmp.eq.s32.totalorder %v1536, %v1561
    %vm1571 = vcmp.eq.s32.totalorder %v1539, %v1561
    %vm1572 = vcmp.eq.s32.totalorder %v1542, %v1561
    %vm1573 = vcmp.eq.s32.totalorder %v1545, %v1561
    %vm1574 = vcmp.eq.s32.totalorder %v1548, %v1561
    %vm1575 = vcmp.eq.s32.totalorder %v1551, %v1561
    %vm1576 = vcmp.eq.s32.totalorder %v1554, %v1561
    %vm1577 = vcmp.eq.s32.totalorder %v1557, %v1561
    %vm1578 = vmand %vm1477, %vm1562
    %vm1579 = vmand %vm1478, %vm1563
    %vm1580 = vmand %vm1479, %vm1564
    %vm1581 = vmand %vm1480, %vm1565
    %vm1582 = vmand %vm1481, %vm1566
    %vm1583 = vmand %vm1482, %vm1567
    %vm1584 = vmand %vm1483, %vm1568
    %vm1585 = vmand %vm1484, %vm1569
    %vm1586 = vmand %vm1485, %vm1570
    %vm1587 = vmand %vm1486, %vm1571
    %vm1588 = vmand %vm1487, %vm1572
    %vm1589 = vmand %vm1488, %vm1573
    %vm1590 = vmand %vm1489, %vm1574
    %vm1591 = vmand %vm1490, %vm1575
    %vm1592 = vmand %vm1491, %vm1576
    %vm1593 = vmand %vm1492, %vm1577
    %v1594 = vsel %vm1477, %v1325, -inf
    %v1595 = vsel %vm1478, %v1331, -inf
    %v1596 = vsel %vm1479, %v1337, -inf
    %v1597 = vsel %vm1480, %v1343, -inf
    %v1598 = vsel %vm1481, %v1349, -inf
    %v1599 = vsel %vm1482, %v1355, -inf
    %v1600 = vsel %vm1483, %v1361, -inf
    %v1601 = vsel %vm1484, %v1367, -inf
    %v1602 = vsel %vm1485, %v1373, -inf
    %v1603 = vsel %vm1486, %v1379, -inf
    %v1604 = vsel %vm1487, %v1385, -inf
    %v1605 = vsel %vm1488, %v1391, -inf
    %v1606 = vsel %vm1489, %v1397, -inf
    %v1607 = vsel %vm1490, %v1403, -inf
    %v1608 = vsel %vm1491, %v1409, -inf
    %v1609 = vsel %vm1492, %v1415, -inf
    %v1610 = vld [vmem:[#allocation2] sm:$0xff]
    %v1611 = vld [vmem:[#allocation2 + $0x8] sm:$0xff]
    %v1612 = vld [vmem:[#allocation2 + $0x10] sm:$0xff]
    %v1613 = vld [vmem:[#allocation2 + $0x18] sm:$0xff]
    %v1614 = vld [vmem:[#allocation2 + $0x20] sm:$0xff]
    %v1615 = vld [vmem:[#allocation2 + $0x28] sm:$0xff]
    %v1616 = vld [vmem:[#allocation2 + $0x30] sm:$0xff]
    %v1617 = vld [vmem:[#allocation2 + $0x38] sm:$0xff]
    %v1618 = vld [vmem:[#allocation2 + $0x40] sm:$0xff]
    %v1619 = vld [vmem:[#allocation2 + $0x48] sm:$0xff]
    %v1620 = vld [vmem:[#allocation2 + $0x50] sm:$0xff]
    %v1621 = vld [vmem:[#allocation2 + $0x58] sm:$0xff]
    %v1622 = vld [vmem:[#allocation2 + $0x60] sm:$0xff]
    %v1623 = vld [vmem:[#allocation2 + $0x68] sm:$0xff]
    %v1624 = vld [vmem:[#allocation2 + $0x70] sm:$0xff]
    %v1625 = vld [vmem:[#allocation2 + $0x78] sm:$0xff]
    %1626 = vmax.xlane.f32.xlu0 %v1594
    %v1627 = vpop.xlane.xlu0 %1626
    %1628 = vmax.xlane.f32.xlu0 %v1595
    %v1629 = vpop.xlane.xlu0 %1628
    %1630 = vmax.xlane.f32.xlu0 %v1596
    %v1631 = vpop.xlane.xlu0 %1630
    %1632 = vmax.xlane.f32.xlu0 %v1597
    %v1633 = vpop.xlane.xlu0 %1632
    %1634 = vmax.xlane.f32.xlu0 %v1598
    %v1635 = vpop.xlane.xlu0 %1634
    %1636 = vmax.xlane.f32.xlu0 %v1599
    %v1637 = vpop.xlane.xlu0 %1636
    %1638 = vmax.xlane.f32.xlu0 %v1600
    %v1639 = vpop.xlane.xlu0 %1638
    %1640 = vmax.xlane.f32.xlu0 %v1601
    %v1641 = vpop.xlane.xlu0 %1640
    %1642 = vmax.xlane.f32.xlu0 %v1602
    %v1643 = vpop.xlane.xlu0 %1642
    %1644 = vmax.xlane.f32.xlu0 %v1603
    %v1645 = vpop.xlane.xlu0 %1644
    %1646 = vmax.xlane.f32.xlu0 %v1604
    %v1647 = vpop.xlane.xlu0 %1646
    %1648 = vmax.xlane.f32.xlu0 %v1605
    %v1649 = vpop.xlane.xlu0 %1648
    %1650 = vmax.xlane.f32.xlu0 %v1606
    %v1651 = vpop.xlane.xlu0 %1650
    %1652 = vmax.xlane.f32.xlu0 %v1607
    %v1653 = vpop.xlane.xlu0 %1652
    %1654 = vmax.xlane.f32.xlu0 %v1608
    %v1655 = vpop.xlane.xlu0 %1654
    %1656 = vmax.xlane.f32.xlu0 %v1609
    %v1657 = vpop.xlane.xlu0 %1656
    %v1658 = vmax.f32 %v1610, %v1627
    %v1659 = vmax.f32 %v1611, %v1629
    %v1660 = vmax.f32 %v1612, %v1631
    %v1661 = vmax.f32 %v1613, %v1633
    %v1662 = vmax.f32 %v1614, %v1635
    %v1663 = vmax.f32 %v1615, %v1637
    %v1664 = vmax.f32 %v1616, %v1639
    %v1665 = vmax.f32 %v1617, %v1641
    %v1666 = vmax.f32 %v1618, %v1643
    %v1667 = vmax.f32 %v1619, %v1645
    %v1668 = vmax.f32 %v1620, %v1647
    %v1669 = vmax.f32 %v1621, %v1649
    %v1670 = vmax.f32 %v1622, %v1651
    %v1671 = vmax.f32 %v1623, %v1653
    %v1672 = vmax.f32 %v1624, %v1655
    %v1673 = vmax.f32 %v1625, %v1657
    %v1674 = vsub.f32 %v1610, %v1658
    %v1675 = vsub.f32 %v1611, %v1659
    %v1676 = vsub.f32 %v1612, %v1660
    %v1677 = vsub.f32 %v1613, %v1661
    %v1678 = vsub.f32 %v1614, %v1662
    %v1679 = vsub.f32 %v1615, %v1663
    %v1680 = vsub.f32 %v1616, %v1664
    %v1681 = vsub.f32 %v1617, %v1665
    %v1682 = vsub.f32 %v1618, %v1666
    %v1683 = vsub.f32 %v1619, %v1667
    %v1684 = vsub.f32 %v1620, %v1668
    %v1685 = vsub.f32 %v1621, %v1669
    %v1686 = vsub.f32 %v1622, %v1670
    %v1687 = vsub.f32 %v1623, %v1671
    %v1688 = vsub.f32 %v1624, %v1672
    %v1689 = vsub.f32 %v1625, %v1673
    %v1690 = vmul.f32 %v1674, 1.442695
    %v1691 = vpow.pop %v1690
    %v1692 = vmul.f32 %v1675, 1.442695
    %v1693 = vpow.pop %v1692
    %v1694 = vmul.f32 %v1676, 1.442695
    %v1695 = vpow.pop %v1694
    %v1696 = vmul.f32 %v1677, 1.442695
    %v1697 = vpow.pop %v1696
    %v1698 = vmul.f32 %v1678, 1.442695
    %v1699 = vpow.pop %v1698
    %v1700 = vmul.f32 %v1679, 1.442695
    %v1701 = vpow.pop %v1700
    %v1702 = vmul.f32 %v1680, 1.442695
    %v1703 = vpow.pop %v1702
    %v1704 = vmul.f32 %v1681, 1.442695
    %v1705 = vpow.pop %v1704
    %v1706 = vmul.f32 %v1682, 1.442695
    %v1707 = vpow.pop %v1706
    %v1708 = vmul.f32 %v1683, 1.442695
    %v1709 = vpow.pop %v1708
    %v1710 = vmul.f32 %v1684, 1.442695
    %v1711 = vpow.pop %v1710
    %v1712 = vmul.f32 %v1685, 1.442695
    %v1713 = vpow.pop %v1712
    %v1714 = vmul.f32 %v1686, 1.442695
    %v1715 = vpow.pop %v1714
    %v1716 = vmul.f32 %v1687, 1.442695
    %v1717 = vpow.pop %v1716
    %v1718 = vmul.f32 %v1688, 1.442695
    %v1719 = vpow.pop %v1718
    %v1720 = vmul.f32 %v1689, 1.442695
    %v1721 = vpow.pop %v1720
    %v1722 = vld [vmem:[#allocation3] sm:$0xff]
    %v1723 = vld [vmem:[#allocation3 + $0x8] sm:$0xff]
    %v1724 = vld [vmem:[#allocation3 + $0x10] sm:$0xff]
    %v1725 = vld [vmem:[#allocation3 + $0x18] sm:$0xff]
    %v1726 = vld [vmem:[#allocation3 + $0x20] sm:$0xff]
    %v1727 = vld [vmem:[#allocation3 + $0x28] sm:$0xff]
    %v1728 = vld [vmem:[#allocation3 + $0x30] sm:$0xff]
    %v1729 = vld [vmem:[#allocation3 + $0x38] sm:$0xff]
    %v1730 = vld [vmem:[#allocation3 + $0x40] sm:$0xff]
    %v1731 = vld [vmem:[#allocation3 + $0x48] sm:$0xff]
    %v1732 = vld [vmem:[#allocation3 + $0x50] sm:$0xff]
    %v1733 = vld [vmem:[#allocation3 + $0x58] sm:$0xff]
    %v1734 = vld [vmem:[#allocation3 + $0x60] sm:$0xff]
    %v1735 = vld [vmem:[#allocation3 + $0x68] sm:$0xff]
    %v1736 = vld [vmem:[#allocation3 + $0x70] sm:$0xff]
    %v1737 = vld [vmem:[#allocation3 + $0x78] sm:$0xff]
    %v1738 = vmul.f32 %v1691, %v1722
    %v1739 = vmul.f32 %v1693, %v1723
    %v1740 = vmul.f32 %v1695, %v1724
    %v1741 = vmul.f32 %v1697, %v1725
    %v1742 = vmul.f32 %v1699, %v1726
    %v1743 = vmul.f32 %v1701, %v1727
    %v1744 = vmul.f32 %v1703, %v1728
    %v1745 = vmul.f32 %v1705, %v1729
    %v1746 = vmul.f32 %v1707, %v1730
    %v1747 = vmul.f32 %v1709, %v1731
    %v1748 = vmul.f32 %v1711, %v1732
    %v1749 = vmul.f32 %v1713, %v1733
    %v1750 = vmul.f32 %v1715, %v1734
    %v1751 = vmul.f32 %v1717, %v1735
    %v1752 = vmul.f32 %v1719, %v1736
    %v1753 = vmul.f32 %v1721, %v1737
    %1755 = vset.pattern.permute.xlu0 0
    %1756 = vperm.xlu0 %1755, %v1658
    %v1757 = vpop.permute.xlu0 %1756
    %1760 = vset.pattern.permute.xlu0 0
    %1761 = vperm.xlu0 %1760, %v1659
    %v1762 = vpop.permute.xlu0 %1761
    %1765 = vset.pattern.permute.xlu0 0
    %1766 = vperm.xlu0 %1765, %v1660
    %v1767 = vpop.permute.xlu0 %1766
    %1770 = vset.pattern.permute.xlu0 0
    %1771 = vperm.xlu0 %1770, %v1661
    %v1772 = vpop.permute.xlu0 %1771
    %1775 = vset.pattern.permute.xlu0 0
    %1776 = vperm.xlu0 %1775, %v1662
    %v1777 = vpop.permute.xlu0 %1776
    %1780 = vset.pattern.permute.xlu0 0
    %1781 = vperm.xlu0 %1780, %v1663
    %v1782 = vpop.permute.xlu0 %1781
    %1785 = vset.pattern.permute.xlu0 0
    %1786 = vperm.xlu0 %1785, %v1664
    %v1787 = vpop.permute.xlu0 %1786
    %1790 = vset.pattern.permute.xlu0 0
    %1791 = vperm.xlu0 %1790, %v1665
    %v1792 = vpop.permute.xlu0 %1791
    %1795 = vset.pattern.permute.xlu0 0
    %1796 = vperm.xlu0 %1795, %v1666
    %v1797 = vpop.permute.xlu0 %1796
    %1800 = vset.pattern.permute.xlu0 0
    %1801 = vperm.xlu0 %1800, %v1667
    %v1802 = vpop.permute.xlu0 %1801
    %1805 = vset.pattern.permute.xlu0 0
    %1806 = vperm.xlu0 %1805, %v1668
    %v1807 = vpop.permute.xlu0 %1806
    %1810 = vset.pattern.permute.xlu0 0
    %1811 = vperm.xlu0 %1810, %v1669
    %v1812 = vpop.permute.xlu0 %1811
    %1815 = vset.pattern.permute.xlu0 0
    %1816 = vperm.xlu0 %1815, %v1670
    %v1817 = vpop.permute.xlu0 %1816
    %1820 = vset.pattern.permute.xlu0 0
    %1821 = vperm.xlu0 %1820, %v1671
    %v1822 = vpop.permute.xlu0 %1821
    %1825 = vset.pattern.permute.xlu0 0
    %1826 = vperm.xlu0 %1825, %v1672
    %v1827 = vpop.permute.xlu0 %1826
    %1830 = vset.pattern.permute.xlu0 0
    %1831 = vperm.xlu0 %1830, %v1673
    %v1832 = vpop.permute.xlu0 %1831
    %v1834 = vsub.f32 %v1594, %v1757
    %v1835 = vsub.f32 %v1595, %v1762
    %v1836 = vsub.f32 %v1596, %v1767
    %v1837 = vsub.f32 %v1597, %v1772
    %v1838 = vsub.f32 %v1598, %v1777
    %v1839 = vsub.f32 %v1599, %v1782
    %v1840 = vsub.f32 %v1600, %v1787
    %v1841 = vsub.f32 %v1601, %v1792
    %v1842 = vsub.f32 %v1602, %v1797
    %v1843 = vsub.f32 %v1603, %v1802
    %v1844 = vsub.f32 %v1604, %v1807
    %v1845 = vsub.f32 %v1605, %v1812
    %v1846 = vsub.f32 %v1606, %v1817
    %v1847 = vsub.f32 %v1607, %v1822
    %v1848 = vsub.f32 %v1608, %v1827
    %v1849 = vsub.f32 %v1609, %v1832
    %v1850 = vmul.f32 %v1834, 1.442695
    %v1851 = vpow.pop %v1850
    %v1852 = vmul.f32 %v1835, 1.442695
    %v1853 = vpow.pop %v1852
    %v1854 = vmul.f32 %v1836, 1.442695
    %v1855 = vpow.pop %v1854
    %v1856 = vmul.f32 %v1837, 1.442695
    %v1857 = vpow.pop %v1856
    %v1858 = vmul.f32 %v1838, 1.442695
    %v1859 = vpow.pop %v1858
    %v1860 = vmul.f32 %v1839, 1.442695
    %v1861 = vpow.pop %v1860
    %v1862 = vmul.f32 %v1840, 1.442695
    %v1863 = vpow.pop %v1862
    %v1864 = vmul.f32 %v1841, 1.442695
    %v1865 = vpow.pop %v1864
    %v1866 = vmul.f32 %v1842, 1.442695
    %v1867 = vpow.pop %v1866
    %v1868 = vmul.f32 %v1843, 1.442695
    %v1869 = vpow.pop %v1868
    %v1870 = vmul.f32 %v1844, 1.442695
    %v1871 = vpow.pop %v1870
    %v1872 = vmul.f32 %v1845, 1.442695
    %v1873 = vpow.pop %v1872
    %v1874 = vmul.f32 %v1846, 1.442695
    %v1875 = vpow.pop %v1874
    %v1876 = vmul.f32 %v1847, 1.442695
    %v1877 = vpow.pop %v1876
    %v1878 = vmul.f32 %v1848, 1.442695
    %v1879 = vpow.pop %v1878
    %v1880 = vmul.f32 %v1849, 1.442695
    %v1881 = vpow.pop %v1880
    %1882 = vadd.xlane.f32.xlu0 %v1851
    %v1883 = vpop.xlane.xlu0 %1882
    %1884 = vadd.xlane.f32.xlu0 %v1853
    %v1885 = vpop.xlane.xlu0 %1884
    %1886 = vadd.xlane.f32.xlu0 %v1855
    %v1887 = vpop.xlane.xlu0 %1886
    %1888 = vadd.xlane.f32.xlu0 %v1857
    %v1889 = vpop.xlane.xlu0 %1888
    %1890 = vadd.xlane.f32.xlu0 %v1859
    %v1891 = vpop.xlane.xlu0 %1890
    %1892 = vadd.xlane.f32.xlu0 %v1861
    %v1893 = vpop.xlane.xlu0 %1892
    %1894 = vadd.xlane.f32.xlu0 %v1863
    %v1895 = vpop.xlane.xlu0 %1894
    %1896 = vadd.xlane.f32.xlu0 %v1865
    %v1897 = vpop.xlane.xlu0 %1896
    %1898 = vadd.xlane.f32.xlu0 %v1867
    %v1899 = vpop.xlane.xlu0 %1898
    %1900 = vadd.xlane.f32.xlu0 %v1869
    %v1901 = vpop.xlane.xlu0 %1900
    %1902 = vadd.xlane.f32.xlu0 %v1871
    %v1903 = vpop.xlane.xlu0 %1902
    %1904 = vadd.xlane.f32.xlu0 %v1873
    %v1905 = vpop.xlane.xlu0 %1904
    %1906 = vadd.xlane.f32.xlu0 %v1875
    %v1907 = vpop.xlane.xlu0 %1906
    %1908 = vadd.xlane.f32.xlu0 %v1877
    %v1909 = vpop.xlane.xlu0 %1908
    %1910 = vadd.xlane.f32.xlu0 %v1879
    %v1911 = vpop.xlane.xlu0 %1910
    %1912 = vadd.xlane.f32.xlu0 %v1881
    %v1913 = vpop.xlane.xlu0 %1912
    %v1914 = vadd.f32 %v1738, %v1883
    %v1915 = vadd.f32 %v1739, %v1885
    %v1916 = vadd.f32 %v1740, %v1887
    %v1917 = vadd.f32 %v1741, %v1889
    %v1918 = vadd.f32 %v1742, %v1891
    %v1919 = vadd.f32 %v1743, %v1893
    %v1920 = vadd.f32 %v1744, %v1895
    %v1921 = vadd.f32 %v1745, %v1897
    %v1922 = vadd.f32 %v1746, %v1899
    %v1923 = vadd.f32 %v1747, %v1901
    %v1924 = vadd.f32 %v1748, %v1903
    %v1925 = vadd.f32 %v1749, %v1905
    %v1926 = vadd.f32 %v1750, %v1907
    %v1927 = vadd.f32 %v1751, %v1909
    %v1928 = vadd.f32 %v1752, %v1911
    %v1929 = vadd.f32 %v1753, %v1913
    %vm1930 = vcmask 7168
    %1931 = vst.msk [vmem:[#allocation3] sm:$0xff] %vm1930, %v1914
    %1932 = vst.msk [vmem:[#allocation3 + $0x8] sm:$0xff] %vm1930, %v1915
    %1933 = vst.msk [vmem:[#allocation3 + $0x10] sm:$0xff] %vm1930, %v1916
    %1934 = vst.msk [vmem:[#allocation3 + $0x18] sm:$0xff] %vm1930, %v1917
    %1935 = vst.msk [vmem:[#allocation3 + $0x20] sm:$0xff] %vm1930, %v1918
    %1936 = vst.msk [vmem:[#allocation3 + $0x28] sm:$0xff] %vm1930, %v1919
    %1937 = vst.msk [vmem:[#allocation3 + $0x30] sm:$0xff] %vm1930, %v1920
    %1938 = vst.msk [vmem:[#allocation3 + $0x38] sm:$0xff] %vm1930, %v1921
    %1939 = vst.msk [vmem:[#allocation3 + $0x40] sm:$0xff] %vm1930, %v1922
    %1940 = vst.msk [vmem:[#allocation3 + $0x48] sm:$0xff] %vm1930, %v1923
    %1941 = vst.msk [vmem:[#allocation3 + $0x50] sm:$0xff] %vm1930, %v1924
    %1942 = vst.msk [vmem:[#allocation3 + $0x58] sm:$0xff] %vm1930, %v1925
    %1943 = vst.msk [vmem:[#allocation3 + $0x60] sm:$0xff] %vm1930, %v1926
    %1944 = vst.msk [vmem:[#allocation3 + $0x68] sm:$0xff] %vm1930, %v1927
    %1945 = vst.msk [vmem:[#allocation3 + $0x70] sm:$0xff] %vm1930, %v1928
    %1946 = vst.msk [vmem:[#allocation3 + $0x78] sm:$0xff] %vm1930, %v1929
    %1947 = vst.msk [vmem:[#allocation2] sm:$0xff] %vm1930, %v1658
    %1948 = vst.msk [vmem:[#allocation2 + $0x8] sm:$0xff] %vm1930, %v1659
    %1949 = vst.msk [vmem:[#allocation2 + $0x10] sm:$0xff] %vm1930, %v1660
    %1950 = vst.msk [vmem:[#allocation2 + $0x18] sm:$0xff] %vm1930, %v1661
    %1951 = vst.msk [vmem:[#allocation2 + $0x20] sm:$0xff] %vm1930, %v1662
    %1952 = vst.msk [vmem:[#allocation2 + $0x28] sm:$0xff] %vm1930, %v1663
    %1953 = vst.msk [vmem:[#allocation2 + $0x30] sm:$0xff] %vm1930, %v1664
    %1954 = vst.msk [vmem:[#allocation2 + $0x38] sm:$0xff] %vm1930, %v1665
    %1955 = vst.msk [vmem:[#allocation2 + $0x40] sm:$0xff] %vm1930, %v1666
    %1956 = vst.msk [vmem:[#allocation2 + $0x48] sm:$0xff] %vm1930, %v1667
    %1957 = vst.msk [vmem:[#allocation2 + $0x50] sm:$0xff] %vm1930, %v1668
    %1958 = vst.msk [vmem:[#allocation2 + $0x58] sm:$0xff] %vm1930, %v1669
    %1959 = vst.msk [vmem:[#allocation2 + $0x60] sm:$0xff] %vm1930, %v1670
    %1960 = vst.msk [vmem:[#allocation2 + $0x68] sm:$0xff] %vm1930, %v1671
    %1961 = vst.msk [vmem:[#allocation2 + $0x70] sm:$0xff] %vm1930, %v1672
    %1962 = vst.msk [vmem:[#allocation2 + $0x78] sm:$0xff] %vm1930, %v1673
    %v1963 = vld [vmem:[#allocation5] sm:$0xff]
    %v1964 = vld [vmem:[#allocation5 + $0x8] sm:$0xff]
    %v1965 = vld [vmem:[#allocation5 + $0x10] sm:$0xff]
    %v1966 = vld [vmem:[#allocation5 + $0x18] sm:$0xff]
    %v1967 = vld [vmem:[#allocation5 + $0x20] sm:$0xff]
    %v1968 = vld [vmem:[#allocation5 + $0x28] sm:$0xff]
    %v1969 = vld [vmem:[#allocation5 + $0x30] sm:$0xff]
    %v1970 = vld [vmem:[#allocation5 + $0x38] sm:$0xff]
    %v1971 = vld [vmem:[#allocation5 + $0x40] sm:$0xff]
    %v1972 = vld [vmem:[#allocation5 + $0x48] sm:$0xff]
    %v1973 = vld [vmem:[#allocation5 + $0x50] sm:$0xff]
    %v1974 = vld [vmem:[#allocation5 + $0x58] sm:$0xff]
    %v1975 = vld [vmem:[#allocation5 + $0x60] sm:$0xff]
    %v1976 = vld [vmem:[#allocation5 + $0x68] sm:$0xff]
    %v1977 = vld [vmem:[#allocation5 + $0x70] sm:$0xff]
    %v1978 = vld [vmem:[#allocation5 + $0x78] sm:$0xff]
    %v1979 = vsel %vm1578, %v1325, 0.0
    %v1980 = vsel %vm1579, %v1331, 0.0
    %v1981 = vsel %vm1580, %v1337, 0.0
    %v1982 = vsel %vm1581, %v1343, 0.0
    %v1983 = vsel %vm1582, %v1349, 0.0
    %v1984 = vsel %vm1583, %v1355, 0.0
    %v1985 = vsel %vm1584, %v1361, 0.0
    %v1986 = vsel %vm1585, %v1367, 0.0
    %v1987 = vsel %vm1586, %v1373, 0.0
    %v1988 = vsel %vm1587, %v1379, 0.0
    %v1989 = vsel %vm1588, %v1385, 0.0
    %v1990 = vsel %vm1589, %v1391, 0.0
    %v1991 = vsel %vm1590, %v1397, 0.0
    %v1992 = vsel %vm1591, %v1403, 0.0
    %v1993 = vsel %vm1592, %v1409, 0.0
    %v1994 = vsel %vm1593, %v1415, 0.0
    %1995 = vadd.xlane.f32.xlu0 %v1979
    %v1996 = vpop.xlane.xlu0 %1995
    %1997 = vadd.xlane.f32.xlu0 %v1980
    %v1998 = vpop.xlane.xlu0 %1997
    %1999 = vadd.xlane.f32.xlu0 %v1981
    %v2000 = vpop.xlane.xlu0 %1999
    %2001 = vadd.xlane.f32.xlu0 %v1982
    %v2002 = vpop.xlane.xlu0 %2001
    %2003 = vadd.xlane.f32.xlu0 %v1983
    %v2004 = vpop.xlane.xlu0 %2003
    %2005 = vadd.xlane.f32.xlu0 %v1984
    %v2006 = vpop.xlane.xlu0 %2005
    %2007 = vadd.xlane.f32.xlu0 %v1985
    %v2008 = vpop.xlane.xlu0 %2007
    %2009 = vadd.xlane.f32.xlu0 %v1986
    %v2010 = vpop.xlane.xlu0 %2009
    %2011 = vadd.xlane.f32.xlu0 %v1987
    %v2012 = vpop.xlane.xlu0 %2011
    %2013 = vadd.xlane.f32.xlu0 %v1988
    %v2014 = vpop.xlane.xlu0 %2013
    %2015 = vadd.xlane.f32.xlu0 %v1989
    %v2016 = vpop.xlane.xlu0 %2015
    %2017 = vadd.xlane.f32.xlu0 %v1990
    %v2018 = vpop.xlane.xlu0 %2017
    %2019 = vadd.xlane.f32.xlu0 %v1991
    %v2020 = vpop.xlane.xlu0 %2019
    %2021 = vadd.xlane.f32.xlu0 %v1992
    %v2022 = vpop.xlane.xlu0 %2021
    %2023 = vadd.xlane.f32.xlu0 %v1993
    %v2024 = vpop.xlane.xlu0 %2023
    %2025 = vadd.xlane.f32.xlu0 %v1994
    %v2026 = vpop.xlane.xlu0 %2025
    %v2027 = vadd.f32 %v1963, %v1996
    %v2028 = vadd.f32 %v1964, %v1998
    %v2029 = vadd.f32 %v1965, %v2000
    %v2030 = vadd.f32 %v1966, %v2002
    %v2031 = vadd.f32 %v1967, %v2004
    %v2032 = vadd.f32 %v1968, %v2006
    %v2033 = vadd.f32 %v1969, %v2008
    %v2034 = vadd.f32 %v1970, %v2010
    %v2035 = vadd.f32 %v1971, %v2012
    %v2036 = vadd.f32 %v1972, %v2014
    %v2037 = vadd.f32 %v1973, %v2016
    %v2038 = vadd.f32 %v1974, %v2018
    %v2039 = vadd.f32 %v1975, %v2020
    %v2040 = vadd.f32 %v1976, %v2022
    %v2041 = vadd.f32 %v1977, %v2024
    %v2042 = vadd.f32 %v1978, %v2026
    %2043 = vst.msk [vmem:[#allocation5] sm:$0xff] %vm1930, %v2027
    %2044 = vst.msk [vmem:[#allocation5 + $0x8] sm:$0xff] %vm1930, %v2028
    %2045 = vst.msk [vmem:[#allocation5 + $0x10] sm:$0xff] %vm1930, %v2029
    %2046 = vst.msk [vmem:[#allocation5 + $0x18] sm:$0xff] %vm1930, %v2030
    %2047 = vst.msk [vmem:[#allocation5 + $0x20] sm:$0xff] %vm1930, %v2031
    %2048 = vst.msk [vmem:[#allocation5 + $0x28] sm:$0xff] %vm1930, %v2032
    %2049 = vst.msk [vmem:[#allocation5 + $0x30] sm:$0xff] %vm1930, %v2033
    %2050 = vst.msk [vmem:[#allocation5 + $0x38] sm:$0xff] %vm1930, %v2034
    %2051 = vst.msk [vmem:[#allocation5 + $0x40] sm:$0xff] %vm1930, %v2035
    %2052 = vst.msk [vmem:[#allocation5 + $0x48] sm:$0xff] %vm1930, %v2036
    %2053 = vst.msk [vmem:[#allocation5 + $0x50] sm:$0xff] %vm1930, %v2037
    %2054 = vst.msk [vmem:[#allocation5 + $0x58] sm:$0xff] %vm1930, %v2038
    %2055 = vst.msk [vmem:[#allocation5 + $0x60] sm:$0xff] %vm1930, %v2039
    %2056 = vst.msk [vmem:[#allocation5 + $0x68] sm:$0xff] %vm1930, %v2040
    %2057 = vst.msk [vmem:[#allocation5 + $0x70] sm:$0xff] %vm1930, %v2041
    %2058 = vst.msk [vmem:[#allocation5 + $0x78] sm:$0xff] %vm1930, %v2042
    %v2059 = vld [vmem:[#allocation4] sm:$0xff]
    %v2060 = vld [vmem:[#allocation4 + $0x8] sm:$0xff]
    %v2061 = vld [vmem:[#allocation4 + $0x10] sm:$0xff]
    %v2062 = vld [vmem:[#allocation4 + $0x18] sm:$0xff]
    %v2063 = vld [vmem:[#allocation4 + $0x20] sm:$0xff]
    %v2064 = vld [vmem:[#allocation4 + $0x28] sm:$0xff]
    %v2065 = vld [vmem:[#allocation4 + $0x30] sm:$0xff]
    %v2066 = vld [vmem:[#allocation4 + $0x38] sm:$0xff]
    %v2067 = vld [vmem:[#allocation4 + $0x40] sm:$0xff]
    %v2068 = vld [vmem:[#allocation4 + $0x48] sm:$0xff]
    %v2069 = vld [vmem:[#allocation4 + $0x50] sm:$0xff]
    %v2070 = vld [vmem:[#allocation4 + $0x58] sm:$0xff]
    %v2071 = vld [vmem:[#allocation4 + $0x60] sm:$0xff]
    %v2072 = vld [vmem:[#allocation4 + $0x68] sm:$0xff]
    %v2073 = vld [vmem:[#allocation4 + $0x70] sm:$0xff]
    %v2074 = vld [vmem:[#allocation4 + $0x78] sm:$0xff]
    %v2075 = vsel %vm1578, 1.0, 0.0
    %v2076 = vsel %vm1579, 1.0, 0.0
    %v2077 = vsel %vm1580, 1.0, 0.0
    %v2078 = vsel %vm1581, 1.0, 0.0
    %v2079 = vsel %vm1582, 1.0, 0.0
    %v2080 = vsel %vm1583, 1.0, 0.0
    %v2081 = vsel %vm1584, 1.0, 0.0
    %v2082 = vsel %vm1585, 1.0, 0.0
    %v2083 = vsel %vm1586, 1.0, 0.0
    %v2084 = vsel %vm1587, 1.0, 0.0
    %v2085 = vsel %vm1588, 1.0, 0.0
    %v2086 = vsel %vm1589, 1.0, 0.0
    %v2087 = vsel %vm1590, 1.0, 0.0
    %v2088 = vsel %vm1591, 1.0, 0.0
    %v2089 = vsel %vm1592, 1.0, 0.0
    %v2090 = vsel %vm1593, 1.0, 0.0
    %2091 = vadd.xlane.f32.xlu0 %v2075
    %v2092 = vpop.xlane.xlu0 %2091
    %2093 = vadd.xlane.f32.xlu0 %v2076
    %v2094 = vpop.xlane.xlu0 %2093
    %2095 = vadd.xlane.f32.xlu0 %v2077
    %v2096 = vpop.xlane.xlu0 %2095
    %2097 = vadd.xlane.f32.xlu0 %v2078
    %v2098 = vpop.xlane.xlu0 %2097
    %2099 = vadd.xlane.f32.xlu0 %v2079
    %v2100 = vpop.xlane.xlu0 %2099
    %2101 = vadd.xlane.f32.xlu0 %v2080
    %v2102 = vpop.xlane.xlu0 %2101
    %2103 = vadd.xlane.f32.xlu0 %v2081
    %v2104 = vpop.xlane.xlu0 %2103
    %2105 = vadd.xlane.f32.xlu0 %v2082
    %v2106 = vpop.xlane.xlu0 %2105
    %2107 = vadd.xlane.f32.xlu0 %v2083
    %v2108 = vpop.xlane.xlu0 %2107
    %2109 = vadd.xlane.f32.xlu0 %v2084
    %v2110 = vpop.xlane.xlu0 %2109
    %2111 = vadd.xlane.f32.xlu0 %v2085
    %v2112 = vpop.xlane.xlu0 %2111
    %2113 = vadd.xlane.f32.xlu0 %v2086
    %v2114 = vpop.xlane.xlu0 %2113
    %2115 = vadd.xlane.f32.xlu0 %v2087
    %v2116 = vpop.xlane.xlu0 %2115
    %2117 = vadd.xlane.f32.xlu0 %v2088
    %v2118 = vpop.xlane.xlu0 %2117
    %2119 = vadd.xlane.f32.xlu0 %v2089
    %v2120 = vpop.xlane.xlu0 %2119
    %2121 = vadd.xlane.f32.xlu0 %v2090
    %v2122 = vpop.xlane.xlu0 %2121
    %v2123 = vadd.f32 %v2059, %v2092
    %v2124 = vadd.f32 %v2060, %v2094
    %v2125 = vadd.f32 %v2061, %v2096
    %v2126 = vadd.f32 %v2062, %v2098
    %v2127 = vadd.f32 %v2063, %v2100
    %v2128 = vadd.f32 %v2064, %v2102
    %v2129 = vadd.f32 %v2065, %v2104
    %v2130 = vadd.f32 %v2066, %v2106
    %v2131 = vadd.f32 %v2067, %v2108
    %v2132 = vadd.f32 %v2068, %v2110
    %v2133 = vadd.f32 %v2069, %v2112
    %v2134 = vadd.f32 %v2070, %v2114
    %v2135 = vadd.f32 %v2071, %v2116
    %v2136 = vadd.f32 %v2072, %v2118
    %v2137 = vadd.f32 %v2073, %v2120
    %v2138 = vadd.f32 %v2074, %v2122
    %2139 = vst.msk [vmem:[#allocation4] sm:$0xff] %vm1930, %v2123
    %2140 = vst.msk [vmem:[#allocation4 + $0x8] sm:$0xff] %vm1930, %v2124
    %2141 = vst.msk [vmem:[#allocation4 + $0x10] sm:$0xff] %vm1930, %v2125
    %2142 = vst.msk [vmem:[#allocation4 + $0x18] sm:$0xff] %vm1930, %v2126
    %2143 = vst.msk [vmem:[#allocation4 + $0x20] sm:$0xff] %vm1930, %v2127
    %2144 = vst.msk [vmem:[#allocation4 + $0x28] sm:$0xff] %vm1930, %v2128
    %2145 = vst.msk [vmem:[#allocation4 + $0x30] sm:$0xff] %vm1930, %v2129
    %2146 = vst.msk [vmem:[#allocation4 + $0x38] sm:$0xff] %vm1930, %v2130
    %2147 = vst.msk [vmem:[#allocation4 + $0x40] sm:$0xff] %vm1930, %v2131
    %2148 = vst.msk [vmem:[#allocation4 + $0x48] sm:$0xff] %vm1930, %v2132
    %2149 = vst.msk [vmem:[#allocation4 + $0x50] sm:$0xff] %vm1930, %v2133
    %2150 = vst.msk [vmem:[#allocation4 + $0x58] sm:$0xff] %vm1930, %v2134
    %2151 = vst.msk [vmem:[#allocation4 + $0x60] sm:$0xff] %vm1930, %v2135
    %2152 = vst.msk [vmem:[#allocation4 + $0x68] sm:$0xff] %vm1930, %v2136
    %2153 = vst.msk [vmem:[#allocation4 + $0x70] sm:$0xff] %vm1930, %v2137
    %2154 = vst.msk [vmem:[#allocation4 + $0x78] sm:$0xff] %vm1930, %v2138
    // Predicated region
    $region26: #{tpu_custom_call.1} parent=1 // pred_check
      %p2155 = pneg %p31
    $region27: #{tpu_custom_call.1} parent=1 // pred_check_branch
      %2157 = sbr.rel (%p2155) target = $region29
    $region28: #{tpu_custom_call.1} parent=1 // pred_region
      %v2158 = vld [vmem:[#allocation2] sm:$0xff]
      %v2159 = vld [vmem:[#allocation2 + $0x8] sm:$0xff]
      %v2160 = vld [vmem:[#allocation2 + $0x10] sm:$0xff]
      %v2161 = vld [vmem:[#allocation2 + $0x18] sm:$0xff]
      %v2162 = vld [vmem:[#allocation2 + $0x20] sm:$0xff]
      %v2163 = vld [vmem:[#allocation2 + $0x28] sm:$0xff]
      %v2164 = vld [vmem:[#allocation2 + $0x30] sm:$0xff]
      %v2165 = vld [vmem:[#allocation2 + $0x38] sm:$0xff]
      %v2166 = vld [vmem:[#allocation2 + $0x40] sm:$0xff]
      %v2167 = vld [vmem:[#allocation2 + $0x48] sm:$0xff]
      %v2168 = vld [vmem:[#allocation2 + $0x50] sm:$0xff]
      %v2169 = vld [vmem:[#allocation2 + $0x58] sm:$0xff]
      %v2170 = vld [vmem:[#allocation2 + $0x60] sm:$0xff]
      %v2171 = vld [vmem:[#allocation2 + $0x68] sm:$0xff]
      %v2172 = vld [vmem:[#allocation2 + $0x70] sm:$0xff]
      %v2173 = vld [vmem:[#allocation2 + $0x78] sm:$0xff]
      %v2174 = vld [vmem:[#allocation3] sm:$0xff]
      %v2175 = vld [vmem:[#allocation3 + $0x8] sm:$0xff]
      %v2176 = vld [vmem:[#allocation3 + $0x10] sm:$0xff]
      %v2177 = vld [vmem:[#allocation3 + $0x18] sm:$0xff]
      %v2178 = vld [vmem:[#allocation3 + $0x20] sm:$0xff]
      %v2179 = vld [vmem:[#allocation3 + $0x28] sm:$0xff]
      %v2180 = vld [vmem:[#allocation3 + $0x30] sm:$0xff]
      %v2181 = vld [vmem:[#allocation3 + $0x38] sm:$0xff]
      %v2182 = vld [vmem:[#allocation3 + $0x40] sm:$0xff]
      %v2183 = vld [vmem:[#allocation3 + $0x48] sm:$0xff]
      %v2184 = vld [vmem:[#allocation3 + $0x50] sm:$0xff]
      %v2185 = vld [vmem:[#allocation3 + $0x58] sm:$0xff]
      %v2186 = vld [vmem:[#allocation3 + $0x60] sm:$0xff]
      %v2187 = vld [vmem:[#allocation3 + $0x68] sm:$0xff]
      %v2188 = vld [vmem:[#allocation3 + $0x70] sm:$0xff]
      %v2189 = vld [vmem:[#allocation3 + $0x78] sm:$0xff]
      %v2190 = vlog2.pop %v2174
      %v2191 = vmul.f32 %v2190, 0.6931472
      %v2192 = vlog2.pop %v2175
      %v2193 = vmul.f32 %v2192, 0.6931472
      %v2194 = vlog2.pop %v2176
      %v2195 = vmul.f32 %v2194, 0.6931472
      %v2196 = vlog2.pop %v2177
      %v2197 = vmul.f32 %v2196, 0.6931472
      %v2198 = vlog2.pop %v2178
      %v2199 = vmul.f32 %v2198, 0.6931472
      %v2200 = vlog2.pop %v2179
      %v2201 = vmul.f32 %v2200, 0.6931472
      %v2202 = vlog2.pop %v2180
      %v2203 = vmul.f32 %v2202, 0.6931472
      %v2204 = vlog2.pop %v2181
      %v2205 = vmul.f32 %v2204, 0.6931472
      %v2206 = vlog2.pop %v2182
      %v2207 = vmul.f32 %v2206, 0.6931472
      %v2208 = vlog2.pop %v2183
      %v2209 = vmul.f32 %v2208, 0.6931472
      %v2210 = vlog2.pop %v2184
      %v2211 = vmul.f32 %v2210, 0.6931472
      %v2212 = vlog2.pop %v2185
      %v2213 = vmul.f32 %v2212, 0.6931472
      %v2214 = vlog2.pop %v2186
      %v2215 = vmul.f32 %v2214, 0.6931472
      %v2216 = vlog2.pop %v2187
      %v2217 = vmul.f32 %v2216, 0.6931472
      %v2218 = vlog2.pop %v2188
      %v2219 = vmul.f32 %v2218, 0.6931472
      %v2220 = vlog2.pop %v2189
      %v2221 = vmul.f32 %v2220, 0.6931472
      %v2222 = vadd.f32 %v2158, %v2191
      %v2223 = vadd.f32 %v2159, %v2193
      %v2224 = vadd.f32 %v2160, %v2195
      %v2225 = vadd.f32 %v2161, %v2197
      %v2226 = vadd.f32 %v2162, %v2199
      %v2227 = vadd.f32 %v2163, %v2201
      %v2228 = vadd.f32 %v2164, %v2203
      %v2229 = vadd.f32 %v2165, %v2205
      %v2230 = vadd.f32 %v2166, %v2207
      %v2231 = vadd.f32 %v2167, %v2209
      %v2232 = vadd.f32 %v2168, %v2211
      %v2233 = vadd.f32 %v2169, %v2213
      %v2234 = vadd.f32 %v2170, %v2215
      %v2235 = vadd.f32 %v2171, %v2217
      %v2236 = vadd.f32 %v2172, %v2219
      %v2237 = vadd.f32 %v2173, %v2221
      %v2238 = vld [vmem:[#allocation4] sm:$0xff]
      %v2239 = vld [vmem:[#allocation4 + $0x8] sm:$0xff]
      %v2240 = vld [vmem:[#allocation4 + $0x10] sm:$0xff]
      %v2241 = vld [vmem:[#allocation4 + $0x18] sm:$0xff]
      %v2242 = vld [vmem:[#allocation4 + $0x20] sm:$0xff]
      %v2243 = vld [vmem:[#allocation4 + $0x28] sm:$0xff]
      %v2244 = vld [vmem:[#allocation4 + $0x30] sm:$0xff]
      %v2245 = vld [vmem:[#allocation4 + $0x38] sm:$0xff]
      %v2246 = vld [vmem:[#allocation4 + $0x40] sm:$0xff]
      %v2247 = vld [vmem:[#allocation4 + $0x48] sm:$0xff]
      %v2248 = vld [vmem:[#allocation4 + $0x50] sm:$0xff]
      %v2249 = vld [vmem:[#allocation4 + $0x58] sm:$0xff]
      %v2250 = vld [vmem:[#allocation4 + $0x60] sm:$0xff]
      %v2251 = vld [vmem:[#allocation4 + $0x68] sm:$0xff]
      %v2252 = vld [vmem:[#allocation4 + $0x70] sm:$0xff]
      %v2253 = vld [vmem:[#allocation4 + $0x78] sm:$0xff]
      %v2254 = vld [vmem:[#allocation5] sm:$0xff]
      %v2255 = vld [vmem:[#allocation5 + $0x8] sm:$0xff]
      %v2256 = vld [vmem:[#allocation5 + $0x10] sm:$0xff]
      %v2257 = vld [vmem:[#allocation5 + $0x18] sm:$0xff]
      %v2258 = vld [vmem:[#allocation5 + $0x20] sm:$0xff]
      %v2259 = vld [vmem:[#allocation5 + $0x28] sm:$0xff]
      %v2260 = vld [vmem:[#allocation5 + $0x30] sm:$0xff]
      %v2261 = vld [vmem:[#allocation5 + $0x38] sm:$0xff]
      %v2262 = vld [vmem:[#allocation5 + $0x40] sm:$0xff]
      %v2263 = vld [vmem:[#allocation5 + $0x48] sm:$0xff]
      %v2264 = vld [vmem:[#allocation5 + $0x50] sm:$0xff]
      %v2265 = vld [vmem:[#allocation5 + $0x58] sm:$0xff]
      %v2266 = vld [vmem:[#allocation5 + $0x60] sm:$0xff]
      %v2267 = vld [vmem:[#allocation5 + $0x68] sm:$0xff]
      %v2268 = vld [vmem:[#allocation5 + $0x70] sm:$0xff]
      %v2269 = vld [vmem:[#allocation5 + $0x78] sm:$0xff]
      %v2270 = vmul.f32 %v2238, %v2222
      %v2271 = vmul.f32 %v2239, %v2223
      %v2272 = vmul.f32 %v2240, %v2224
      %v2273 = vmul.f32 %v2241, %v2225
      %v2274 = vmul.f32 %v2242, %v2226
      %v2275 = vmul.f32 %v2243, %v2227
      %v2276 = vmul.f32 %v2244, %v2228
      %v2277 = vmul.f32 %v2245, %v2229
      %v2278 = vmul.f32 %v2246, %v2230
      %v2279 = vmul.f32 %v2247, %v2231
      %v2280 = vmul.f32 %v2248, %v2232
      %v2281 = vmul.f32 %v2249, %v2233
      %v2282 = vmul.f32 %v2250, %v2234
      %v2283 = vmul.f32 %v2251, %v2235
      %v2284 = vmul.f32 %v2252, %v2236
      %v2285 = vmul.f32 %v2253, %v2237
      %v2286 = vsub.f32 %v2254, %v2270
      %v2287 = vsub.f32 %v2255, %v2271
      %v2288 = vsub.f32 %v2256, %v2272
      %v2289 = vsub.f32 %v2257, %v2273
      %v2290 = vsub.f32 %v2258, %v2274
      %v2291 = vsub.f32 %v2259, %v2275
      %v2292 = vsub.f32 %v2260, %v2276
      %v2293 = vsub.f32 %v2261, %v2277
      %v2294 = vsub.f32 %v2262, %v2278
      %v2295 = vsub.f32 %v2263, %v2279
      %v2296 = vsub.f32 %v2264, %v2280
      %v2297 = vsub.f32 %v2265, %v2281
      %v2298 = vsub.f32 %v2266, %v2282
      %v2299 = vsub.f32 %v2267, %v2283
      %v2300 = vsub.f32 %v2268, %v2284
      %v2301 = vsub.f32 %v2269, %v2285
      %v2302 = vmax.f32 %v2238, 1.0
      %v2303 = vmax.f32 %v2239, 1.0
      %v2304 = vmax.f32 %v2240, 1.0
      %v2305 = vmax.f32 %v2241, 1.0
      %v2306 = vmax.f32 %v2242, 1.0
      %v2307 = vmax.f32 %v2243, 1.0
      %v2308 = vmax.f32 %v2244, 1.0
      %v2309 = vmax.f32 %v2245, 1.0
      %v2310 = vmax.f32 %v2246, 1.0
      %v2311 = vmax.f32 %v2247, 1.0
      %v2312 = vmax.f32 %v2248, 1.0
      %v2313 = vmax.f32 %v2249, 1.0
      %v2314 = vmax.f32 %v2250, 1.0
      %v2315 = vmax.f32 %v2251, 1.0
      %v2316 = vmax.f32 %v2252, 1.0
      %v2317 = vmax.f32 %v2253, 1.0
      %v2318 = vrcp.pop %v2302
      %v2319 = vmul.f32 %v2286, %v2318
      %v2320 = vrcp.pop %v2303
      %v2321 = vmul.f32 %v2287, %v2320
      %v2322 = vrcp.pop %v2304
      %v2323 = vmul.f32 %v2288, %v2322
      %v2324 = vrcp.pop %v2305
      %v2325 = vmul.f32 %v2289, %v2324
      %v2326 = vrcp.pop %v2306
      %v2327 = vmul.f32 %v2290, %v2326
      %v2328 = vrcp.pop %v2307
      %v2329 = vmul.f32 %v2291, %v2328
      %v2330 = vrcp.pop %v2308
      %v2331 = vmul.f32 %v2292, %v2330
      %v2332 = vrcp.pop %v2309
      %v2333 = vmul.f32 %v2293, %v2332
      %v2334 = vrcp.pop %v2310
      %v2335 = vmul.f32 %v2294, %v2334
      %v2336 = vrcp.pop %v2311
      %v2337 = vmul.f32 %v2295, %v2336
      %v2338 = vrcp.pop %v2312
      %v2339 = vmul.f32 %v2296, %v2338
      %v2340 = vrcp.pop %v2313
      %v2341 = vmul.f32 %v2297, %v2340
      %v2342 = vrcp.pop %v2314
      %v2343 = vmul.f32 %v2298, %v2342
      %v2344 = vrcp.pop %v2315
      %v2345 = vmul.f32 %v2299, %v2344
      %v2346 = vrcp.pop %v2316
      %v2347 = vmul.f32 %v2300, %v2346
      %v2348 = vrcp.pop %v2317
      %v2349 = vmul.f32 %v2301, %v2348
      %v2350 = vmul.f32 %v2319, -1.0
      %v2351 = vmul.f32 %v2321, -1.0
      %v2352 = vmul.f32 %v2323, -1.0
      %v2353 = vmul.f32 %v2325, -1.0
      %v2354 = vmul.f32 %v2327, -1.0
      %v2355 = vmul.f32 %v2329, -1.0
      %v2356 = vmul.f32 %v2331, -1.0
      %v2357 = vmul.f32 %v2333, -1.0
      %v2358 = vmul.f32 %v2335, -1.0
      %v2359 = vmul.f32 %v2337, -1.0
      %v2360 = vmul.f32 %v2339, -1.0
      %v2361 = vmul.f32 %v2341, -1.0
      %v2362 = vmul.f32 %v2343, -1.0
      %v2363 = vmul.f32 %v2345, -1.0
      %v2364 = vmul.f32 %v2347, -1.0
      %v2365 = vmul.f32 %v2349, -1.0
      %vm2366 = vcmp.lt.s32.totalorder %v1437, 16
      %vm2367 = vcmp.lt.s32.totalorder %v1438, 16
      %vm2368 = vcmp.lt.s32.totalorder %v1439, 16
      %vm2369 = vcmp.lt.s32.totalorder %v1440, 16
      %vm2370 = vcmp.lt.s32.totalorder %v1441, 16
      %vm2371 = vcmp.lt.s32.totalorder %v1442, 16
      %vm2372 = vcmp.lt.s32.totalorder %v1443, 16
      %vm2373 = vcmp.lt.s32.totalorder %v1444, 16
      %vm2374 = vcmp.lt.s32.totalorder %v1445, 16
      %vm2375 = vcmp.lt.s32.totalorder %v1446, 16
      %vm2376 = vcmp.lt.s32.totalorder %v1447, 16
      %vm2377 = vcmp.lt.s32.totalorder %v1448, 16
      %vm2378 = vcmp.lt.s32.totalorder %v1449, 16
      %vm2379 = vcmp.lt.s32.totalorder %v1450, 16
      %vm2380 = vcmp.lt.s32.totalorder %v1451, 16
      %vm2381 = vcmp.lt.s32.totalorder %v1452, 16
      %v2382 = vsel %vm2366, %v2350, 0.0
      %v2383 = vsel %vm2367, %v2351, 0.0
      %v2384 = vsel %vm2368, %v2352, 0.0
      %v2385 = vsel %vm2369, %v2353, 0.0
      %v2386 = vsel %vm2370, %v2354, 0.0
      %v2387 = vsel %vm2371, %v2355, 0.0
      %v2388 = vsel %vm2372, %v2356, 0.0
      %v2389 = vsel %vm2373, %v2357, 0.0
      %v2390 = vsel %vm2374, %v2358, 0.0
      %v2391 = vsel %vm2375, %v2359, 0.0
      %v2392 = vsel %vm2376, %v2360, 0.0
      %v2393 = vsel %vm2377, %v2361, 0.0
      %v2394 = vsel %vm2378, %v2362, 0.0
      %v2395 = vsel %vm2379, %v2363, 0.0
      %v2396 = vsel %vm2380, %v2364, 0.0
      %v2397 = vsel %vm2381, %v2365, 0.0
      %2398 = vst.msk [vmem:[%s4] sm:$0xff] %vm1930, %v2382
      %2399 = vst.msk [vmem:[%s4 + $0x8] sm:$0xff] %vm1930, %v2383
      %2400 = vst.msk [vmem:[%s4 + $0x10] sm:$0xff] %vm1930, %v2384
      %2401 = vst.msk [vmem:[%s4 + $0x18] sm:$0xff] %vm1930, %v2385
      %2402 = vst.msk [vmem:[%s4 + $0x20] sm:$0xff] %vm1930, %v2386
      %2403 = vst.msk [vmem:[%s4 + $0x28] sm:$0xff] %vm1930, %v2387
      %2404 = vst.msk [vmem:[%s4 + $0x30] sm:$0xff] %vm1930, %v2388
      %2405 = vst.msk [vmem:[%s4 + $0x38] sm:$0xff] %vm1930, %v2389
      %2406 = vst.msk [vmem:[%s4 + $0x40] sm:$0xff] %vm1930, %v2390
      %2407 = vst.msk [vmem:[%s4 + $0x48] sm:$0xff] %vm1930, %v2391
      %2408 = vst.msk [vmem:[%s4 + $0x50] sm:$0xff] %vm1930, %v2392
      %2409 = vst.msk [vmem:[%s4 + $0x58] sm:$0xff] %vm1930, %v2393
      %2410 = vst.msk [vmem:[%s4 + $0x60] sm:$0xff] %vm1930, %v2394
      %2411 = vst.msk [vmem:[%s4 + $0x68] sm:$0xff] %vm1930, %v2395
      %2412 = vst.msk [vmem:[%s4 + $0x70] sm:$0xff] %vm1930, %v2396
      %2413 = vst.msk [vmem:[%s4 + $0x78] sm:$0xff] %vm1930, %v2397
    $region29: #{tpu_custom_call.1} parent=1 // pred_fallthru
      _
    // Predicated region
    $region30: #{tpu_custom_call.1} parent=1 // pred_check
      _
    $region31: #{tpu_custom_call.1} parent=1 // pred_check_branch
      %2415 = sbr.rel (0) target = $region33
    $region32: #{tpu_custom_call.1} parent=1 // pred_region
      _
    $region33: #{tpu_custom_call.1} parent=1 // pred_fallthru
      _
    // Predicated region
    $region34: #{tpu_custom_call.1} parent=1 // pred_check
      _
    $region35: #{tpu_custom_call.1} parent=1 // pred_check_branch
      %2417 = sbr.rel (0) target = $region37
    $region36: #{tpu_custom_call.1} parent=1 // pred_region
      _
    $region37: #{tpu_custom_call.1} parent=1 // pred_fallthru
      _
    %2418 = vsyncpa [#allocation7], 1

</llo_original>
